<compile_context>
chip_gen: v5e
topology: v5e:2x2
jax: 0.10.0
libtpu: 0.0.40
codegen_flags: <defaults>
</compile_context>

<pallas_src>
import functools

import jax
import jax.numpy as jnp
from jax.experimental import pallas as pl
from jax.experimental.pallas import tpu as pltpu


def _slab_width(hidden_size):
    # Packed output columns: [h (H) | c (H) | pred padded]; lane-dense (mult of 128).
    return max(128, ((2 * hidden_size + 2 + 127) // 128) * 128)


def _tracking_lstm_kernel(x_ref, h0_ref, c0_ref,
                          ws_ref, wi_ref, bi_ref, wp_ref, bp_ref,
                          out_ref,
                          xw_scr, hs_scr, cs_scr,
                          *, seq_len, batch, hidden_size, continuous_stack):
    T, B, H = seq_len, batch, hidden_size
    pp = wp_ref.shape[1]

    # ---- Stage 1: input projection hoisted over ALL timesteps (big-M MXU push).
    #      bf16 operands, f32 accumulation; result cached in VMEM scratch.
    xw = jnp.dot(x_ref[...].reshape(T * B, 3 * H), wi_ref[...],
                 preferred_element_type=jnp.float32) + bi_ref[...]       # (T*B, 4H)
    xw_scr[...] = xw.reshape(T, B, 4 * H)

    # Loop-invariant reads hoisted above the serial recurrence.
    ws = ws_ref[...]              # (H, 4H) f32 -> recurrence stays f32 (no drift)
    h0 = h0_ref[...]              # (B, H)  f32
    c0 = c0_ref[...]

    # ---- Stage 2: serial recurrence; only h @ W_state is on the critical path.
    def step(i, carry):
        h, c = carry
        z = jnp.dot(h, ws, preferred_element_type=jnp.float32) + xw_scr[i]  # (B,4H)
        s = jax.nn.sigmoid(z)                        # one EUP pass over all 4 gates
        g_t = jnp.tanh(z[:, 3 * H:4 * H])
        c_new = c * s[:, H:2 * H] + s[:, 0:H] * g_t  # c*sig(f) + sig(i)*tanh(g)
        h_new = s[:, 2 * H:3 * H] * jnp.tanh(c_new)  # sig(o)*tanh(c')
        hs_scr[i] = h_new
        cs_scr[i] = c_new
        return h_new, c_new

    jax.lax.fori_loop(0, T, step, (h0, c0), unroll=True)

    # ---- Stage 3: prediction head batched over T*B rows, all f32.
    h_all = hs_scr[...]                               # (T, B, H)
    c_all = cs_scr[...]
    logits = jnp.dot(h_all.reshape(T * B, H), wp_ref[...],
                     preferred_element_type=jnp.float32) + bp_ref[...]   # (T*B, pp)
    if continuous_stack:
        pred = jax.nn.sigmoid(logits)
    else:
        # Padding bias is -1e30 -> exp underflows to 0; exact softmax over real cols.
        m = jnp.max(logits, axis=-1, keepdims=True)
        e = jnp.exp(logits - m)
        pred = e / jnp.sum(e, axis=-1, keepdims=True)

    # One unmasked, lane-dense store: [h | c | pred(padded)].
    out_ref[...] = jnp.concatenate(
        [h_all, c_all, pred.reshape(T, B, pp)], axis=-1).astype(out_ref.dtype)


def prepare_params(params):
    """Pack logical f32 params into the kernel's layout.

    W_state, W_pred, biases stay f32 (serial path / accuracy); W_input is bf16
    for the single big MXU push.
    """
    H = params["w_state"].shape[0]
    pp = _slab_width(H) - 2 * H
    w_state = params["w_state"].astype(jnp.float32)                  # (H, 4H)
    w_input = params["w_input"].astype(jnp.bfloat16)                 # (3H, 4H)
    b_input = params["b_input"].reshape(1, 4 * H).astype(jnp.float32)
    w_pred = jnp.zeros((H, pp), jnp.float32).at[:, :2].set(params["w_pred"])
    b_pred = jnp.full((1, pp), -1e30, jnp.float32).at[:, :2].set(
        params["b_pred"].reshape(1, 2))
    return {"w_state": w_state, "w_input": w_input, "b_input": b_input,
            "w_pred": w_pred, "b_pred": b_pred, "hidden_size": H}


def tracking_lstm_sequence(xs, h0, c0, prepared, *, continuous_stack=False):
    """Run T TrackingLSTM steps in ONE pallas_call invocation.

    xs: (T, B, 3H), h0/c0: (B, H).
    Returns (preds (T,B,2), h_seq (T,B,H), c_seq (T,B,H)).
    """
    T, B, three_h = xs.shape
    H = prepared["hidden_size"]
    assert three_h == 3 * H and h0.shape == (B, H) and c0.shape == (B, H)
    pp = prepared["w_pred"].shape[1]
    slab = 2 * H + pp

    kernel = functools.partial(_tracking_lstm_kernel, seq_len=T, batch=B,
                               hidden_size=H, continuous_stack=continuous_stack)

    xs_bf16 = xs.astype(jnp.bfloat16)
    h0 = h0.astype(jnp.float32)
    c0 = c0.astype(jnp.float32)

    flops = (2 * T * B * (3 * H) * (4 * H)        # input projection (batched)
             + 2 * T * B * H * (4 * H)            # recurrence matmuls
             + 2 * T * B * H * pp)                # prediction head (batched)
    transcendentals = T * B * (4 * H + 2 * H + pp)
    bytes_accessed = (xs_bf16.size * 2 + (h0.size + c0.size) * 4
                      + prepared["w_state"].size * 4 + prepared["w_input"].size * 2
                      + prepared["b_input"].size * 4
                      + prepared["w_pred"].size * 4 + prepared["b_pred"].size * 4
                      + T * B * slab * 4)

    grid_spec = pltpu.PrefetchScalarGridSpec(
        num_scalar_prefetch=0,
        grid=(1,),                                   # whole sequence, one invocation
        in_specs=[
            pl.BlockSpec((T, B, 3 * H), lambda i: (0, 0, 0)),   # xs (full)
            pl.BlockSpec((B, H), lambda i: (0, 0)),             # h0
            pl.BlockSpec((B, H), lambda i: (0, 0)),             # c0
            pl.BlockSpec((H, 4 * H), lambda i: (0, 0)),         # W_state (f32)
            pl.BlockSpec((3 * H, 4 * H), lambda i: (0, 0)),     # W_input (bf16)
            pl.BlockSpec((1, 4 * H), lambda i: (0, 0)),         # b_input
            pl.BlockSpec((H, pp), lambda i: (0, 0)),            # W_pred (padded, f32)
            pl.BlockSpec((1, pp), lambda i: (0, 0)),            # b_pred (padded)
        ],
        out_specs=pl.BlockSpec((T, B, slab), lambda i: (0, 0, 0)),
        scratch_shapes=[
            pltpu.VMEM((T, B, 4 * H), jnp.float32),   # hoisted x @ W_input + b
            pltpu.VMEM((T, B, H), jnp.float32),       # h sequence
            pltpu.VMEM((T, B, H), jnp.float32),       # c sequence
        ],
    )

    slab_out = pl.pallas_call(
        kernel,
        grid_spec=grid_spec,
        out_shape=jax.ShapeDtypeStruct((T, B, slab), jnp.float32),
        compiler_params=pltpu.CompilerParams(dimension_semantics=("arbitrary",)),
        cost_estimate=pl.CostEstimate(flops=flops,
                                      transcendentals=transcendentals,
                                      bytes_accessed=bytes_accessed),
    )(xs_bf16, h0, c0,
      prepared["w_state"], prepared["w_input"], prepared["b_input"],
      prepared["w_pred"], prepared["b_pred"])

    h_seq = slab_out[:, :, 0:H]
    c_seq = slab_out[:, :, H:2 * H]
    preds = slab_out[:, :, 2 * H:2 * H + 2]
    return preds, h_seq, c_seq


def tracking_lstm(inputs, h, c, prepared, *, continuous_stack=False):
    """Single step matching the PyTorch forward: returns (prediction, h_new, c_new)."""
    preds, hs, cs = tracking_lstm_sequence(inputs[None], h, c, prepared,
                                           continuous_stack=continuous_stack)
    return preds[0], hs[0], cs[0]


def _reference_step(x, h, c, params, continuous_stack=False):
    """Pure-JAX f32 reference mirroring the PyTorch forward, for verification."""
    H = h.shape[1]
    z = h @ params["w_state"] + x @ params["w_input"] + params["b_input"]
    i_g, f_g, o_g, g_g = (z[:, k * H:(k + 1) * H] for k in range(4))
    c_new = c * jax.nn.sigmoid(f_g) + jax.nn.sigmoid(i_g) * jnp.tanh(g_g)
    h_new = jax.nn.sigmoid(o_g) * jnp.tanh(c_new)
    logits = h_new @ params["w_pred"] + params["b_pred"]
    pred = (jax.nn.sigmoid(logits) if continuous_stack
            else jax.nn.softmax(logits, axis=-1))
    return pred, h_new, c_new


def _init_params(key, hidden_size):
    """Deterministic PyTorch-Linear-style uniform(-1/sqrt(fan_in)) init (f32, logical)."""
    H = hidden_size
    ks = jax.random.split(key, 5)

    def uni(k, shape, fan_in):
        bound = 1.0 / jnp.sqrt(jnp.float32(fan_in))
        return jax.random.uniform(k, shape, jnp.float32, -bound, bound)

    return {
        "w_state": uni(ks[0], (H, 4 * H), H),          # Linear(H, 4H, bias=False)
        "w_input": uni(ks[1], (3 * H, 4 * H), 3 * H),  # Linear(3H, 4H)
        "b_input": uni(ks[2], (1, 4 * H), 3 * H),
        "w_pred": uni(ks[3], (H, 2), H),               # Linear(H, 2)
        "b_pred": uni(ks[4], (1, 2), H),
    }


if __name__ == "__main__":
    B, H, T = 8, 32, 8
    key = jax.random.PRNGKey(0)
    k_par, k_x, k_h, k_c = jax.random.split(key, 4)

    params = _init_params(k_par, H)
    prepared = prepare_params(params)

    xs = jax.random.normal(k_x, (T, B, 3 * H), jnp.float32)
    h0 = jax.random.normal(k_h, (B, H), jnp.float32)
    c0 = jax.random.normal(k_c, (B, H), jnp.float32)

    # Whole sequence in one pallas_call (softmax prediction path).
    preds, h_seq, c_seq = tracking_lstm_sequence(xs, h0, c0, prepared,
                                                 continuous_stack=False)
    jax.block_until_ready((preds, h_seq, c_seq))

    # continuous_stack (sigmoid prediction) path — same h/c dynamics.
    preds_cs, _, _ = tracking_lstm_sequence(xs, h0, c0, prepared,
                                            continuous_stack=True)
    jax.block_until_ready(preds_cs)

    # Verify every step against the pure-f32 reference (input projection uses
    # bf16 MXU operands, so tolerance is relaxed accordingly).
    tol = dict(atol=3e-2, rtol=3e-2)
    h_r, c_r = h0, c0
    for t in range(T):
        p_r, h_r, c_r = _reference_step(xs[t], h_r, c_r, params,
                                        continuous_stack=False)
        p_sig_r = jax.nn.sigmoid(h_r @ params["w_pred"] + params["b_pred"])
        assert jnp.allclose(preds[t], p_r, **tol), f"pred step {t}"
        assert jnp.allclose(preds_cs[t], p_sig_r, **tol), f"sigmoid pred step {t}"
        assert jnp.allclose(h_seq[t], h_r, **tol), f"h step {t}"
        assert jnp.allclose(c_seq[t], c_r, **tol), f"c step {t}"

    # Also exercise the single-step API that mirrors the module's forward().
    p1, h1, c1 = tracking_lstm(xs[0], h0, c0, prepared, continuous_stack=False)
    jax.block_until_ready((p1, h1, c1))
    p1_r, h1_r, c1_r = _reference_step(xs[0], h0, c0, params)
    assert jnp.allclose(p1, p1_r, **tol)
    assert jnp.allclose(h1, h1_r, **tol)
    assert jnp.allclose(c1, c1_r, **tol)

    print("KERNEL_OK")
</pallas_src>

<mosaic_0001>
module attributes {stable_mosaic.version = 11 : i64} {
  func.func @_tracking_lstm_kernel(%arg0: i32, %arg1: memref<8x8x96xbf16, #tpu.memory_space<vmem>>, %arg2: memref<8x32xf32, #tpu.memory_space<vmem>>, %arg3: memref<8x32xf32, #tpu.memory_space<vmem>>, %arg4: memref<32x128xf32, #tpu.memory_space<vmem>>, %arg5: memref<96x128xbf16, #tpu.memory_space<vmem>>, %arg6: memref<1x128xf32, #tpu.memory_space<vmem>>, %arg7: memref<32x64xf32, #tpu.memory_space<vmem>>, %arg8: memref<1x64xf32, #tpu.memory_space<vmem>>, %arg9: memref<8x8x128xf32, #tpu.memory_space<vmem>>, %arg10: memref<8x8x128xf32, #tpu.memory_space<vmem>>, %arg11: memref<8x8x32xf32, #tpu.memory_space<vmem>>, %arg12: memref<8x8x32xf32, #tpu.memory_space<vmem>>) attributes {dimension_semantics = [#tpu.dimension_semantics<arbitrary>], iteration_bounds = array<i64: 1>, scalar_prefetch = 0 : i64, scratch_operands = 3 : i64, tpu.core_type = #tpu.core_type<tc>, window_params = [{pipeline_mode = #tpu.pipeline_mode<synchronous>, transform_indices = @transform_0, window_bounds = array<i64: 8, 8, 96>}, {pipeline_mode = #tpu.pipeline_mode<synchronous>, transform_indices = @transform_1, window_bounds = array<i64: 8, 32>}, {pipeline_mode = #tpu.pipeline_mode<synchronous>, transform_indices = @transform_2, window_bounds = array<i64: 8, 32>}, {pipeline_mode = #tpu.pipeline_mode<synchronous>, transform_indices = @transform_3, window_bounds = array<i64: 32, 128>}, {pipeline_mode = #tpu.pipeline_mode<synchronous>, transform_indices = @transform_4, window_bounds = array<i64: 96, 128>}, {pipeline_mode = #tpu.pipeline_mode<synchronous>, transform_indices = @transform_5, window_bounds = array<i64: 1, 128>}, {pipeline_mode = #tpu.pipeline_mode<synchronous>, transform_indices = @transform_6, window_bounds = array<i64: 32, 64>}, {pipeline_mode = #tpu.pipeline_mode<synchronous>, transform_indices = @transform_7, window_bounds = array<i64: 1, 64>}, {pipeline_mode = #tpu.pipeline_mode<synchronous>, transform_indices = @transform_8, window_bounds = array<i64: 8, 8, 128>}]} {
    %c0 = arith.constant 0 : index
    %c0_0 = arith.constant 0 : index
    %c0_1 = arith.constant 0 : index
    %0 = vector.load %arg1[%c0, %c0_0, %c0_1] : memref<8x8x96xbf16, #tpu.memory_space<vmem>>, vector<8x8x96xbf16>
    %1 = vector.shape_cast %0 : vector<8x8x96xbf16> to vector<64x96xbf16>
    %c0_2 = arith.constant 0 : index
    %c0_3 = arith.constant 0 : index
    %2 = vector.load %arg5[%c0_2, %c0_3] : memref<96x128xbf16, #tpu.memory_space<vmem>>, vector<96x128xbf16>
    %cst = arith.constant dense<0.000000e+00> : vector<64x128xf32>
    %3 = tpu.matmul %1, %2, %cst {dimension_numbers = #tpu.dot_dimension_numbers<[1], [0], [0], [1], [0, 0, 1, 1], [], []>} : vector<64x96xbf16>, vector<96x128xbf16>, vector<64x128xf32> -> vector<64x128xf32>
    %c0_4 = arith.constant 0 : index
    %c0_5 = arith.constant 0 : index
    %4 = vector.load %arg6[%c0_4, %c0_5] : memref<1x128xf32, #tpu.memory_space<vmem>>, vector<1x128xf32>
    %5 = vector.broadcast %4 : vector<1x128xf32> to vector<64x128xf32>
    %6 = arith.addf %3, %5 : vector<64x128xf32>
    %7 = vector.shape_cast %6 : vector<64x128xf32> to vector<8x8x128xf32>
    %c0_6 = arith.constant 0 : index
    %c0_7 = arith.constant 0 : index
    %c0_8 = arith.constant 0 : index
    %8 = vector.load %arg10[%c0_6, %c0_7, %c0_8] : memref<8x8x128xf32, #tpu.memory_space<vmem>>, vector<8x8x128xf32>
    tpu.vector_store %arg10[%c0_6, %c0_7, %c0_8], %7 {strides = array<i32>} : memref<8x8x128xf32, #tpu.memory_space<vmem>>, vector<8x8x128xf32>,
    %c0_9 = arith.constant 0 : index
    %c0_10 = arith.constant 0 : index
    %9 = vector.load %arg4[%c0_9, %c0_10] : memref<32x128xf32, #tpu.memory_space<vmem>>, vector<32x128xf32>
    %c0_11 = arith.constant 0 : index
    %c0_12 = arith.constant 0 : index
    %10 = vector.load %arg2[%c0_11, %c0_12] : memref<8x32xf32, #tpu.memory_space<vmem>>, vector<8x32xf32>
    %c0_13 = arith.constant 0 : index
    %c0_14 = arith.constant 0 : index
    %11 = vector.load %arg3[%c0_13, %c0_14] : memref<8x32xf32, #tpu.memory_space<vmem>>, vector<8x32xf32>
    %c0_i32 = arith.constant 0 : i32
    %cst_15 = arith.constant dense<0.000000e+00> : vector<8x128xf32>
    %12 = tpu.matmul %10, %9, %cst_15 {dimension_numbers = #tpu.dot_dimension_numbers<[1], [0], [0], [1], [0, 0, 1, 1], [], []>} : vector<8x32xf32>, vector<32x128xf32>, vector<8x128xf32> -> vector<8x128xf32>
    %13 = arith.index_cast %c0_i32 : i32 to index
    %c0_16 = arith.constant 0 : index
    %c0_17 = arith.constant 0 : index
    %14 = vector.load %arg10[%13, %c0_16, %c0_17] : memref<8x8x128xf32, #tpu.memory_space<vmem>>, vector<1x8x128xf32>
    %15 = vector.shape_cast %14 : vector<1x8x128xf32> to vector<8x128xf32>
    %16 = arith.addf %12, %15 : vector<8x128xf32>
    %17 = arith.negf %16 : vector<8x128xf32>
    %18 = math.exp %17 : vector<8x128xf32>
    %cst_18 = arith.constant 1.000000e+00 : f32
    %19 = vector.broadcast %cst_18 : f32 to vector<8x128xf32>
    %20 = arith.addf %19, %18 : vector<8x128xf32>
    %21 = arith.divf %19, %20 : vector<8x128xf32>
    %22 = vector.extract_strided_slice %16 {offsets = [0, 96], sizes = [8, 32], strides = [1, 1]} : vector<8x128xf32> to vector<8x32xf32>
    %23 = math.tanh %22 : vector<8x32xf32>
    %24 = vector.extract_strided_slice %21 {offsets = [0, 32], sizes = [8, 32], strides = [1, 1]} : vector<8x128xf32> to vector<8x32xf32>
    %25 = arith.mulf %11, %24 : vector<8x32xf32>
    %26 = vector.extract_strided_slice %21 {offsets = [0, 0], sizes = [8, 32], strides = [1, 1]} : vector<8x128xf32> to vector<8x32xf32>
    %27 = arith.mulf %26, %23 : vector<8x32xf32>
    %28 = arith.addf %25, %27 : vector<8x32xf32>
    %29 = vector.extract_strided_slice %21 {offsets = [0, 64], sizes = [8, 32], strides = [1, 1]} : vector<8x128xf32> to vector<8x32xf32>
    %30 = math.tanh %28 : vector<8x32xf32>
    %31 = arith.mulf %29, %30 : vector<8x32xf32>
    %32 = arith.index_cast %c0_i32 : i32 to index
    %c0_19 = arith.constant 0 : index
    %c0_20 = arith.constant 0 : index
    %33 = vector.load %arg11[%32, %c0_19, %c0_20] : memref<8x8x32xf32, #tpu.memory_space<vmem>>, vector<1x8x32xf32>
    %34 = vector.shape_cast %33 : vector<1x8x32xf32> to vector<8x32xf32>
    %35 = vector.shape_cast %31 : vector<8x32xf32> to vector<1x8x32xf32>
    tpu.vector_store %arg11[%32, %c0_19, %c0_20], %35 {strides = array<i32>} : memref<8x8x32xf32, #tpu.memory_space<vmem>>, vector<1x8x32xf32>,
    %36 = arith.index_cast %c0_i32 : i32 to index
    %c0_21 = arith.constant 0 : index
    %c0_22 = arith.constant 0 : index
    %37 = vector.load %arg12[%36, %c0_21, %c0_22] : memref<8x8x32xf32, #tpu.memory_space<vmem>>, vector<1x8x32xf32>
    %38 = vector.shape_cast %37 : vector<1x8x32xf32> to vector<8x32xf32>
    %39 = vector.shape_cast %28 : vector<8x32xf32> to vector<1x8x32xf32>
    tpu.vector_store %arg12[%36, %c0_21, %c0_22], %39 {strides = array<i32>} : memref<8x8x32xf32, #tpu.memory_space<vmem>>, vector<1x8x32xf32>,
    %c1_i32 = arith.constant 1 : i32
    %cst_23 = arith.constant dense<0.000000e+00> : vector<8x128xf32>
    %40 = tpu.matmul %31, %9, %cst_23 {dimension_numbers = #tpu.dot_dimension_numbers<[1], [0], [0], [1], [0, 0, 1, 1], [], []>} : vector<8x32xf32>, vector<32x128xf32>, vector<8x128xf32> -> vector<8x128xf32>
    %41 = arith.index_cast %c1_i32 : i32 to index
    %c0_24 = arith.constant 0 : index
    %c0_25 = arith.constant 0 : index
    %42 = vector.load %arg10[%41, %c0_24, %c0_25] : memref<8x8x128xf32, #tpu.memory_space<vmem>>, vector<1x8x128xf32>
    %43 = vector.shape_cast %42 : vector<1x8x128xf32> to vector<8x128xf32>
    %44 = arith.addf %40, %43 : vector<8x128xf32>
    %45 = arith.negf %44 : vector<8x128xf32>
    %46 = math.exp %45 : vector<8x128xf32>
    %cst_26 = arith.constant 1.000000e+00 : f32
    %47 = vector.broadcast %cst_26 : f32 to vector<8x128xf32>
    %48 = arith.addf %47, %46 : vector<8x128xf32>
    %49 = arith.divf %47, %48 : vector<8x128xf32>
    %50 = vector.extract_strided_slice %44 {offsets = [0, 96], sizes = [8, 32], strides = [1, 1]} : vector<8x128xf32> to vector<8x32xf32>
    %51 = math.tanh %50 : vector<8x32xf32>
    %52 = vector.extract_strided_slice %49 {offsets = [0, 32], sizes = [8, 32], strides = [1, 1]} : vector<8x128xf32> to vector<8x32xf32>
    %53 = arith.mulf %28, %52 : vector<8x32xf32>
    %54 = vector.extract_strided_slice %49 {offsets = [0, 0], sizes = [8, 32], strides = [1, 1]} : vector<8x128xf32> to vector<8x32xf32>
    %55 = arith.mulf %54, %51 : vector<8x32xf32>
    %56 = arith.addf %53, %55 : vector<8x32xf32>
    %57 = vector.extract_strided_slice %49 {offsets = [0, 64], sizes = [8, 32], strides = [1, 1]} : vector<8x128xf32> to vector<8x32xf32>
    %58 = math.tanh %56 : vector<8x32xf32>
    %59 = arith.mulf %57, %58 : vector<8x32xf32>
    %60 = arith.index_cast %c1_i32 : i32 to index
    %c0_27 = arith.constant 0 : index
    %c0_28 = arith.constant 0 : index
    %61 = vector.load %arg11[%60, %c0_27, %c0_28] : memref<8x8x32xf32, #tpu.memory_space<vmem>>, vector<1x8x32xf32>
    %62 = vector.shape_cast %61 : vector<1x8x32xf32> to vector<8x32xf32>
    %63 = vector.shape_cast %59 : vector<8x32xf32> to vector<1x8x32xf32>
    tpu.vector_store %arg11[%60, %c0_27, %c0_28], %63 {strides = array<i32>} : memref<8x8x32xf32, #tpu.memory_space<vmem>>, vector<1x8x32xf32>,
    %64 = arith.index_cast %c1_i32 : i32 to index
    %c0_29 = arith.constant 0 : index
    %c0_30 = arith.constant 0 : index
    %65 = vector.load %arg12[%64, %c0_29, %c0_30] : memref<8x8x32xf32, #tpu.memory_space<vmem>>, vector<1x8x32xf32>
    %66 = vector.shape_cast %65 : vector<1x8x32xf32> to vector<8x32xf32>
    %67 = vector.shape_cast %56 : vector<8x32xf32> to vector<1x8x32xf32>
    tpu.vector_store %arg12[%64, %c0_29, %c0_30], %67 {strides = array<i32>} : memref<8x8x32xf32, #tpu.memory_space<vmem>>, vector<1x8x32xf32>,
    %c2_i32 = arith.constant 2 : i32
    %cst_31 = arith.constant dense<0.000000e+00> : vector<8x128xf32>
    %68 = tpu.matmul %59, %9, %cst_31 {dimension_numbers = #tpu.dot_dimension_numbers<[1], [0], [0], [1], [0, 0, 1, 1], [], []>} : vector<8x32xf32>, vector<32x128xf32>, vector<8x128xf32> -> vector<8x128xf32>
    %69 = arith.index_cast %c2_i32 : i32 to index
    %c0_32 = arith.constant 0 : index
    %c0_33 = arith.constant 0 : index
    %70 = vector.load %arg10[%69, %c0_32, %c0_33] : memref<8x8x128xf32, #tpu.memory_space<vmem>>, vector<1x8x128xf32>
    %71 = vector.shape_cast %70 : vector<1x8x128xf32> to vector<8x128xf32>
    %72 = arith.addf %68, %71 : vector<8x128xf32>
    %73 = arith.negf %72 : vector<8x128xf32>
    %74 = math.exp %73 : vector<8x128xf32>
    %cst_34 = arith.constant 1.000000e+00 : f32
    %75 = vector.broadcast %cst_34 : f32 to vector<8x128xf32>
    %76 = arith.addf %75, %74 : vector<8x128xf32>
    %77 = arith.divf %75, %76 : vector<8x128xf32>
    %78 = vector.extract_strided_slice %72 {offsets = [0, 96], sizes = [8, 32], strides = [1, 1]} : vector<8x128xf32> to vector<8x32xf32>
    %79 = math.tanh %78 : vector<8x32xf32>
    %80 = vector.extract_strided_slice %77 {offsets = [0, 32], sizes = [8, 32], strides = [1, 1]} : vector<8x128xf32> to vector<8x32xf32>
    %81 = arith.mulf %56, %80 : vector<8x32xf32>
    %82 = vector.extract_strided_slice %77 {offsets = [0, 0], sizes = [8, 32], strides = [1, 1]} : vector<8x128xf32> to vector<8x32xf32>
    %83 = arith.mulf %82, %79 : vector<8x32xf32>
    %84 = arith.addf %81, %83 : vector<8x32xf32>
    %85 = vector.extract_strided_slice %77 {offsets = [0, 64], sizes = [8, 32], strides = [1, 1]} : vector<8x128xf32> to vector<8x32xf32>
    %86 = math.tanh %84 : vector<8x32xf32>
    %87 = arith.mulf %85, %86 : vector<8x32xf32>
    %88 = arith.index_cast %c2_i32 : i32 to index
    %c0_35 = arith.constant 0 : index
    %c0_36 = arith.constant 0 : index
    %89 = vector.load %arg11[%88, %c0_35, %c0_36] : memref<8x8x32xf32, #tpu.memory_space<vmem>>, vector<1x8x32xf32>
    %90 = vector.shape_cast %89 : vector<1x8x32xf32> to vector<8x32xf32>
    %91 = vector.shape_cast %87 : vector<8x32xf32> to vector<1x8x32xf32>
    tpu.vector_store %arg11[%88, %c0_35, %c0_36], %91 {strides = array<i32>} : memref<8x8x32xf32, #tpu.memory_space<vmem>>, vector<1x8x32xf32>,
    %92 = arith.index_cast %c2_i32 : i32 to index
    %c0_37 = arith.constant 0 : index
    %c0_38 = arith.constant 0 : index
    %93 = vector.load %arg12[%92, %c0_37, %c0_38] : memref<8x8x32xf32, #tpu.memory_space<vmem>>, vector<1x8x32xf32>
    %94 = vector.shape_cast %93 : vector<1x8x32xf32> to vector<8x32xf32>
    %95 = vector.shape_cast %84 : vector<8x32xf32> to vector<1x8x32xf32>
    tpu.vector_store %arg12[%92, %c0_37, %c0_38], %95 {strides = array<i32>} : memref<8x8x32xf32, #tpu.memory_space<vmem>>, vector<1x8x32xf32>,
    %c3_i32 = arith.constant 3 : i32
    %cst_39 = arith.constant dense<0.000000e+00> : vector<8x128xf32>
    %96 = tpu.matmul %87, %9, %cst_39 {dimension_numbers = #tpu.dot_dimension_numbers<[1], [0], [0], [1], [0, 0, 1, 1], [], []>} : vector<8x32xf32>, vector<32x128xf32>, vector<8x128xf32> -> vector<8x128xf32>
    %97 = arith.index_cast %c3_i32 : i32 to index
    %c0_40 = arith.constant 0 : index
    %c0_41 = arith.constant 0 : index
    %98 = vector.load %arg10[%97, %c0_40, %c0_41] : memref<8x8x128xf32, #tpu.memory_space<vmem>>, vector<1x8x128xf32>
    %99 = vector.shape_cast %98 : vector<1x8x128xf32> to vector<8x128xf32>
    %100 = arith.addf %96, %99 : vector<8x128xf32>
    %101 = arith.negf %100 : vector<8x128xf32>
    %102 = math.exp %101 : vector<8x128xf32>
    %cst_42 = arith.constant 1.000000e+00 : f32
    %103 = vector.broadcast %cst_42 : f32 to vector<8x128xf32>
    %104 = arith.addf %103, %102 : vector<8x128xf32>
    %105 = arith.divf %103, %104 : vector<8x128xf32>
    %106 = vector.extract_strided_slice %100 {offsets = [0, 96], sizes = [8, 32], strides = [1, 1]} : vector<8x128xf32> to vector<8x32xf32>
    %107 = math.tanh %106 : vector<8x32xf32>
    %108 = vector.extract_strided_slice %105 {offsets = [0, 32], sizes = [8, 32], strides = [1, 1]} : vector<8x128xf32> to vector<8x32xf32>
    %109 = arith.mulf %84, %108 : vector<8x32xf32>
    %110 = vector.extract_strided_slice %105 {offsets = [0, 0], sizes = [8, 32], strides = [1, 1]} : vector<8x128xf32> to vector<8x32xf32>
    %111 = arith.mulf %110, %107 : vector<8x32xf32>
    %112 = arith.addf %109, %111 : vector<8x32xf32>
    %113 = vector.extract_strided_slice %105 {offsets = [0, 64], sizes = [8, 32], strides = [1, 1]} : vector<8x128xf32> to vector<8x32xf32>
    %114 = math.tanh %112 : vector<8x32xf32>
    %115 = arith.mulf %113, %114 : vector<8x32xf32>
    %116 = arith.index_cast %c3_i32 : i32 to index
    %c0_43 = arith.constant 0 : index
    %c0_44 = arith.constant 0 : index
    %117 = vector.load %arg11[%116, %c0_43, %c0_44] : memref<8x8x32xf32, #tpu.memory_space<vmem>>, vector<1x8x32xf32>
    %118 = vector.shape_cast %117 : vector<1x8x32xf32> to vector<8x32xf32>
    %119 = vector.shape_cast %115 : vector<8x32xf32> to vector<1x8x32xf32>
    tpu.vector_store %arg11[%116, %c0_43, %c0_44], %119 {strides = array<i32>} : memref<8x8x32xf32, #tpu.memory_space<vmem>>, vector<1x8x32xf32>,
    %120 = arith.index_cast %c3_i32 : i32 to index
    %c0_45 = arith.constant 0 : index
    %c0_46 = arith.constant 0 : index
    %121 = vector.load %arg12[%120, %c0_45, %c0_46] : memref<8x8x32xf32, #tpu.memory_space<vmem>>, vector<1x8x32xf32>
    %122 = vector.shape_cast %121 : vector<1x8x32xf32> to vector<8x32xf32>
    %123 = vector.shape_cast %112 : vector<8x32xf32> to vector<1x8x32xf32>
    tpu.vector_store %arg12[%120, %c0_45, %c0_46], %123 {strides = array<i32>} : memref<8x8x32xf32, #tpu.memory_space<vmem>>, vector<1x8x32xf32>,
    %c4_i32 = arith.constant 4 : i32
    %cst_47 = arith.constant dense<0.000000e+00> : vector<8x128xf32>
    %124 = tpu.matmul %115, %9, %cst_47 {dimension_numbers = #tpu.dot_dimension_numbers<[1], [0], [0], [1], [0, 0, 1, 1], [], []>} : vector<8x32xf32>, vector<32x128xf32>, vector<8x128xf32> -> vector<8x128xf32>
    %125 = arith.index_cast %c4_i32 : i32 to index
    %c0_48 = arith.constant 0 : index
    %c0_49 = arith.constant 0 : index
    %126 = vector.load %arg10[%125, %c0_48, %c0_49] : memref<8x8x128xf32, #tpu.memory_space<vmem>>, vector<1x8x128xf32>
    %127 = vector.shape_cast %126 : vector<1x8x128xf32> to vector<8x128xf32>
    %128 = arith.addf %124, %127 : vector<8x128xf32>
    %129 = arith.negf %128 : vector<8x128xf32>
    %130 = math.exp %129 : vector<8x128xf32>
    %cst_50 = arith.constant 1.000000e+00 : f32
    %131 = vector.broadcast %cst_50 : f32 to vector<8x128xf32>
    %132 = arith.addf %131, %130 : vector<8x128xf32>
    %133 = arith.divf %131, %132 : vector<8x128xf32>
    %134 = vector.extract_strided_slice %128 {offsets = [0, 96], sizes = [8, 32], strides = [1, 1]} : vector<8x128xf32> to vector<8x32xf32>
    %135 = math.tanh %134 : vector<8x32xf32>
    %136 = vector.extract_strided_slice %133 {offsets = [0, 32], sizes = [8, 32], strides = [1, 1]} : vector<8x128xf32> to vector<8x32xf32>
    %137 = arith.mulf %112, %136 : vector<8x32xf32>
    %138 = vector.extract_strided_slice %133 {offsets = [0, 0], sizes = [8, 32], strides = [1, 1]} : vector<8x128xf32> to vector<8x32xf32>
    %139 = arith.mulf %138, %135 : vector<8x32xf32>
    %140 = arith.addf %137, %139 : vector<8x32xf32>
    %141 = vector.extract_strided_slice %133 {offsets = [0, 64], sizes = [8, 32], strides = [1, 1]} : vector<8x128xf32> to vector<8x32xf32>
    %142 = math.tanh %140 : vector<8x32xf32>
    %143 = arith.mulf %141, %142 : vector<8x32xf32>
    %144 = arith.index_cast %c4_i32 : i32 to index
    %c0_51 = arith.constant 0 : index
    %c0_52 = arith.constant 0 : index
    %145 = vector.load %arg11[%144, %c0_51, %c0_52] : memref<8x8x32xf32, #tpu.memory_space<vmem>>, vector<1x8x32xf32>
    %146 = vector.shape_cast %145 : vector<1x8x32xf32> to vector<8x32xf32>
    %147 = vector.shape_cast %143 : vector<8x32xf32> to vector<1x8x32xf32>
    tpu.vector_store %arg11[%144, %c0_51, %c0_52], %147 {strides = array<i32>} : memref<8x8x32xf32, #tpu.memory_space<vmem>>, vector<1x8x32xf32>,
    %148 = arith.index_cast %c4_i32 : i32 to index
    %c0_53 = arith.constant 0 : index
    %c0_54 = arith.constant 0 : index
    %149 = vector.load %arg12[%148, %c0_53, %c0_54] : memref<8x8x32xf32, #tpu.memory_space<vmem>>, vector<1x8x32xf32>
    %150 = vector.shape_cast %149 : vector<1x8x32xf32> to vector<8x32xf32>
    %151 = vector.shape_cast %140 : vector<8x32xf32> to vector<1x8x32xf32>
    tpu.vector_store %arg12[%148, %c0_53, %c0_54], %151 {strides = array<i32>} : memref<8x8x32xf32, #tpu.memory_space<vmem>>, vector<1x8x32xf32>,
    %c5_i32 = arith.constant 5 : i32
    %cst_55 = arith.constant dense<0.000000e+00> : vector<8x128xf32>
    %152 = tpu.matmul %143, %9, %cst_55 {dimension_numbers = #tpu.dot_dimension_numbers<[1], [0], [0], [1], [0, 0, 1, 1], [], []>} : vector<8x32xf32>, vector<32x128xf32>, vector<8x128xf32> -> vector<8x128xf32>
    %153 = arith.index_cast %c5_i32 : i32 to index
    %c0_56 = arith.constant 0 : index
    %c0_57 = arith.constant 0 : index
    %154 = vector.load %arg10[%153, %c0_56, %c0_57] : memref<8x8x128xf32, #tpu.memory_space<vmem>>, vector<1x8x128xf32>
    %155 = vector.shape_cast %154 : vector<1x8x128xf32> to vector<8x128xf32>
    %156 = arith.addf %152, %155 : vector<8x128xf32>
    %157 = arith.negf %156 : vector<8x128xf32>
    %158 = math.exp %157 : vector<8x128xf32>
    %cst_58 = arith.constant 1.000000e+00 : f32
    %159 = vector.broadcast %cst_58 : f32 to vector<8x128xf32>
    %160 = arith.addf %159, %158 : vector<8x128xf32>
    %161 = arith.divf %159, %160 : vector<8x128xf32>
    %162 = vector.extract_strided_slice %156 {offsets = [0, 96], sizes = [8, 32], strides = [1, 1]} : vector<8x128xf32> to vector<8x32xf32>
    %163 = math.tanh %162 : vector<8x32xf32>
    %164 = vector.extract_strided_slice %161 {offsets = [0, 32], sizes = [8, 32], strides = [1, 1]} : vector<8x128xf32> to vector<8x32xf32>
    %165 = arith.mulf %140, %164 : vector<8x32xf32>
    %166 = vector.extract_strided_slice %161 {offsets = [0, 0], sizes = [8, 32], strides = [1, 1]} : vector<8x128xf32> to vector<8x32xf32>
    %167 = arith.mulf %166, %163 : vector<8x32xf32>
    %168 = arith.addf %165, %167 : vector<8x32xf32>
    %169 = vector.extract_strided_slice %161 {offsets = [0, 64], sizes = [8, 32], strides = [1, 1]} : vector<8x128xf32> to vector<8x32xf32>
    %170 = math.tanh %168 : vector<8x32xf32>
    %171 = arith.mulf %169, %170 : vector<8x32xf32>
    %172 = arith.index_cast %c5_i32 : i32 to index
    %c0_59 = arith.constant 0 : index
    %c0_60 = arith.constant 0 : index
    %173 = vector.load %arg11[%172, %c0_59, %c0_60] : memref<8x8x32xf32, #tpu.memory_space<vmem>>, vector<1x8x32xf32>
    %174 = vector.shape_cast %173 : vector<1x8x32xf32> to vector<8x32xf32>
    %175 = vector.shape_cast %171 : vector<8x32xf32> to vector<1x8x32xf32>
    tpu.vector_store %arg11[%172, %c0_59, %c0_60], %175 {strides = array<i32>} : memref<8x8x32xf32, #tpu.memory_space<vmem>>, vector<1x8x32xf32>,
    %176 = arith.index_cast %c5_i32 : i32 to index
    %c0_61 = arith.constant 0 : index
    %c0_62 = arith.constant 0 : index
    %177 = vector.load %arg12[%176, %c0_61, %c0_62] : memref<8x8x32xf32, #tpu.memory_space<vmem>>, vector<1x8x32xf32>
    %178 = vector.shape_cast %177 : vector<1x8x32xf32> to vector<8x32xf32>
    %179 = vector.shape_cast %168 : vector<8x32xf32> to vector<1x8x32xf32>
    tpu.vector_store %arg12[%176, %c0_61, %c0_62], %179 {strides = array<i32>} : memref<8x8x32xf32, #tpu.memory_space<vmem>>, vector<1x8x32xf32>,
    %c6_i32 = arith.constant 6 : i32
    %cst_63 = arith.constant dense<0.000000e+00> : vector<8x128xf32>
    %180 = tpu.matmul %171, %9, %cst_63 {dimension_numbers = #tpu.dot_dimension_numbers<[1], [0], [0], [1], [0, 0, 1, 1], [], []>} : vector<8x32xf32>, vector<32x128xf32>, vector<8x128xf32> -> vector<8x128xf32>
    %181 = arith.index_cast %c6_i32 : i32 to index
    %c0_64 = arith.constant 0 : index
    %c0_65 = arith.constant 0 : index
    %182 = vector.load %arg10[%181, %c0_64, %c0_65] : memref<8x8x128xf32, #tpu.memory_space<vmem>>, vector<1x8x128xf32>
    %183 = vector.shape_cast %182 : vector<1x8x128xf32> to vector<8x128xf32>
    %184 = arith.addf %180, %183 : vector<8x128xf32>
    %185 = arith.negf %184 : vector<8x128xf32>
    %186 = math.exp %185 : vector<8x128xf32>
    %cst_66 = arith.constant 1.000000e+00 : f32
    %187 = vector.broadcast %cst_66 : f32 to vector<8x128xf32>
    %188 = arith.addf %187, %186 : vector<8x128xf32>
    %189 = arith.divf %187, %188 : vector<8x128xf32>
    %190 = vector.extract_strided_slice %184 {offsets = [0, 96], sizes = [8, 32], strides = [1, 1]} : vector<8x128xf32> to vector<8x32xf32>
    %191 = math.tanh %190 : vector<8x32xf32>
    %192 = vector.extract_strided_slice %189 {offsets = [0, 32], sizes = [8, 32], strides = [1, 1]} : vector<8x128xf32> to vector<8x32xf32>
    %193 = arith.mulf %168, %192 : vector<8x32xf32>
    %194 = vector.extract_strided_slice %189 {offsets = [0, 0], sizes = [8, 32], strides = [1, 1]} : vector<8x128xf32> to vector<8x32xf32>
    %195 = arith.mulf %194, %191 : vector<8x32xf32>
    %196 = arith.addf %193, %195 : vector<8x32xf32>
    %197 = vector.extract_strided_slice %189 {offsets = [0, 64], sizes = [8, 32], strides = [1, 1]} : vector<8x128xf32> to vector<8x32xf32>
    %198 = math.tanh %196 : vector<8x32xf32>
    %199 = arith.mulf %197, %198 : vector<8x32xf32>
    %200 = arith.index_cast %c6_i32 : i32 to index
    %c0_67 = arith.constant 0 : index
    %c0_68 = arith.constant 0 : index
    %201 = vector.load %arg11[%200, %c0_67, %c0_68] : memref<8x8x32xf32, #tpu.memory_space<vmem>>, vector<1x8x32xf32>
    %202 = vector.shape_cast %201 : vector<1x8x32xf32> to vector<8x32xf32>
    %203 = vector.shape_cast %199 : vector<8x32xf32> to vector<1x8x32xf32>
    tpu.vector_store %arg11[%200, %c0_67, %c0_68], %203 {strides = array<i32>} : memref<8x8x32xf32, #tpu.memory_space<vmem>>, vector<1x8x32xf32>,
    %204 = arith.index_cast %c6_i32 : i32 to index
    %c0_69 = arith.constant 0 : index
    %c0_70 = arith.constant 0 : index
    %205 = vector.load %arg12[%204, %c0_69, %c0_70] : memref<8x8x32xf32, #tpu.memory_space<vmem>>, vector<1x8x32xf32>
    %206 = vector.shape_cast %205 : vector<1x8x32xf32> to vector<8x32xf32>
    %207 = vector.shape_cast %196 : vector<8x32xf32> to vector<1x8x32xf32>
    tpu.vector_store %arg12[%204, %c0_69, %c0_70], %207 {strides = array<i32>} : memref<8x8x32xf32, #tpu.memory_space<vmem>>, vector<1x8x32xf32>,
    %c7_i32 = arith.constant 7 : i32
    %cst_71 = arith.constant dense<0.000000e+00> : vector<8x128xf32>
    %208 = tpu.matmul %199, %9, %cst_71 {dimension_numbers = #tpu.dot_dimension_numbers<[1], [0], [0], [1], [0, 0, 1, 1], [], []>} : vector<8x32xf32>, vector<32x128xf32>, vector<8x128xf32> -> vector<8x128xf32>
    %209 = arith.index_cast %c7_i32 : i32 to index
    %c0_72 = arith.constant 0 : index
    %c0_73 = arith.constant 0 : index
    %210 = vector.load %arg10[%209, %c0_72, %c0_73] : memref<8x8x128xf32, #tpu.memory_space<vmem>>, vector<1x8x128xf32>
    %211 = vector.shape_cast %210 : vector<1x8x128xf32> to vector<8x128xf32>
    %212 = arith.addf %208, %211 : vector<8x128xf32>
    %213 = arith.negf %212 : vector<8x128xf32>
    %214 = math.exp %213 : vector<8x128xf32>
    %cst_74 = arith.constant 1.000000e+00 : f32
    %215 = vector.broadcast %cst_74 : f32 to vector<8x128xf32>
    %216 = arith.addf %215, %214 : vector<8x128xf32>
    %217 = arith.divf %215, %216 : vector<8x128xf32>
    %218 = vector.extract_strided_slice %212 {offsets = [0, 96], sizes = [8, 32], strides = [1, 1]} : vector<8x128xf32> to vector<8x32xf32>
    %219 = math.tanh %218 : vector<8x32xf32>
    %220 = vector.extract_strided_slice %217 {offsets = [0, 32], sizes = [8, 32], strides = [1, 1]} : vector<8x128xf32> to vector<8x32xf32>
    %221 = arith.mulf %196, %220 : vector<8x32xf32>
    %222 = vector.extract_strided_slice %217 {offsets = [0, 0], sizes = [8, 32], strides = [1, 1]} : vector<8x128xf32> to vector<8x32xf32>
    %223 = arith.mulf %222, %219 : vector<8x32xf32>
    %224 = arith.addf %221, %223 : vector<8x32xf32>
    %225 = vector.extract_strided_slice %217 {offsets = [0, 64], sizes = [8, 32], strides = [1, 1]} : vector<8x128xf32> to vector<8x32xf32>
    %226 = math.tanh %224 : vector<8x32xf32>
    %227 = arith.mulf %225, %226 : vector<8x32xf32>
    %228 = arith.index_cast %c7_i32 : i32 to index
    %c0_75 = arith.constant 0 : index
    %c0_76 = arith.constant 0 : index
    %229 = vector.load %arg11[%228, %c0_75, %c0_76] : memref<8x8x32xf32, #tpu.memory_space<vmem>>, vector<1x8x32xf32>
    %230 = vector.shape_cast %229 : vector<1x8x32xf32> to vector<8x32xf32>
    %231 = vector.shape_cast %227 : vector<8x32xf32> to vector<1x8x32xf32>
    tpu.vector_store %arg11[%228, %c0_75, %c0_76], %231 {strides = array<i32>} : memref<8x8x32xf32, #tpu.memory_space<vmem>>, vector<1x8x32xf32>,
    %232 = arith.index_cast %c7_i32 : i32 to index
    %c0_77 = arith.constant 0 : index
    %c0_78 = arith.constant 0 : index
    %233 = vector.load %arg12[%232, %c0_77, %c0_78] : memref<8x8x32xf32, #tpu.memory_space<vmem>>, vector<1x8x32xf32>
    %234 = vector.shape_cast %233 : vector<1x8x32xf32> to vector<8x32xf32>
    %235 = vector.shape_cast %224 : vector<8x32xf32> to vector<1x8x32xf32>
    tpu.vector_store %arg12[%232, %c0_77, %c0_78], %235 {strides = array<i32>} : memref<8x8x32xf32, #tpu.memory_space<vmem>>, vector<1x8x32xf32>,
    %c8_i32 = arith.constant 8 : i32
    %c0_79 = arith.constant 0 : index
    %c0_80 = arith.constant 0 : index
    %c0_81 = arith.constant 0 : index
    %236 = vector.load %arg11[%c0_79, %c0_80, %c0_81] : memref<8x8x32xf32, #tpu.memory_space<vmem>>, vector<8x8x32xf32>
    %c0_82 = arith.constant 0 : index
    %c0_83 = arith.constant 0 : index
    %c0_84 = arith.constant 0 : index
    %237 = vector.load %arg12[%c0_82, %c0_83, %c0_84] : memref<8x8x32xf32, #tpu.memory_space<vmem>>, vector<8x8x32xf32>
    %238 = vector.shape_cast %236 : vector<8x8x32xf32> to vector<64x32xf32>
    %c0_85 = arith.constant 0 : index
    %c0_86 = arith.constant 0 : index
    %239 = vector.load %arg7[%c0_85, %c0_86] : memref<32x64xf32, #tpu.memory_space<vmem>>, vector<32x64xf32>
    %cst_87 = arith.constant dense<0.000000e+00> : vector<64x64xf32>
    %240 = tpu.matmul %238, %239, %cst_87 {dimension_numbers = #tpu.dot_dimension_numbers<[1], [0], [0], [1], [0, 0, 1, 1], [], []>} : vector<64x32xf32>, vector<32x64xf32>, vector<64x64xf32> -> vector<64x64xf32>
    %c0_88 = arith.constant 0 : index
    %c0_89 = arith.constant 0 : index
    %241 = vector.load %arg8[%c0_88, %c0_89] : memref<1x64xf32, #tpu.memory_space<vmem>>, vector<1x64xf32>
    %242 = vector.broadcast %241 : vector<1x64xf32> to vector<64x64xf32>
    %243 = arith.addf %240, %242 : vector<64x64xf32>
    %cst_90 = arith.constant dense<0xFF800000> : vector<64xf32>
    %244 = vector.multi_reduction <maximumf>, %243, %cst_90 [1] : vector<64x64xf32> to vector<64xf32>
    %245 = vector.shape_cast %244 : vector<64xf32> to vector<64x1xf32>
    %246 = vector.broadcast %245 : vector<64x1xf32> to vector<64x64xf32>
    %247 = arith.subf %243, %246 : vector<64x64xf32>
    %248 = math.exp %247 : vector<64x64xf32>
    %cst_91 = arith.constant dense<0.000000e+00> : vector<64xf32>
    %249 = vector.multi_reduction <add>, %248, %cst_91 [1] : vector<64x64xf32> to vector<64xf32>
    %250 = vector.shape_cast %249 : vector<64xf32> to vector<64x1xf32>
    %251 = vector.broadcast %250 : vector<64x1xf32> to vector<64x64xf32>
    %252 = arith.divf %248, %251 : vector<64x64xf32>
    %253 = vector.shape_cast %252 : vector<64x64xf32> to vector<8x8x64xf32>
    %254 = tpu.concatenate %236, %237, %253 in 2 : vector<8x8x32xf32>, vector<8x8x32xf32>, vector<8x8x64xf32> -> vector<8x8x128xf32>
    %c0_92 = arith.constant 0 : index
    %c0_93 = arith.constant 0 : index
    %c0_94 = arith.constant 0 : index
    %255 = vector.load %arg9[%c0_92, %c0_93, %c0_94] : memref<8x8x128xf32, #tpu.memory_space<vmem>>, vector<8x8x128xf32>
    tpu.vector_store %arg9[%c0_92, %c0_93, %c0_94], %254 {strides = array<i32>} : memref<8x8x128xf32, #tpu.memory_space<vmem>>, vector<8x8x128xf32>,
    return
  }
  func.func @transform_0(%arg0: i32) -> (i32, i32, i32) {
    %c0_i32 = arith.constant 0 : i32
    %c0_i32_0 = arith.constant 0 : i32
    %c0_i32_1 = arith.constant 0 : i32
    %c0_i32_2 = arith.constant 0 : i32
    return %c0_i32, %c0_i32_0, %c0_i32_1 : i32, i32, i32
  }
  func.func @transform_1(%arg0: i32) -> (i32, i32) {
    %c0_i32 = arith.constant 0 : i32
    %c0_i32_0 = arith.constant 0 : i32
    %c0_i32_1 = arith.constant 0 : i32
    return %c0_i32, %c0_i32_0 : i32, i32
  }
  func.func @transform_2(%arg0: i32) -> (i32, i32) {
    %c0_i32 = arith.constant 0 : i32
    %c0_i32_0 = arith.constant 0 : i32
    %c0_i32_1 = arith.constant 0 : i32
    return %c0_i32, %c0_i32_0 : i32, i32
  }
  func.func @transform_3(%arg0: i32) -> (i32, i32) {
    %c0_i32 = arith.constant 0 : i32
    %c0_i32_0 = arith.constant 0 : i32
    %c0_i32_1 = arith.constant 0 : i32
    return %c0_i32, %c0_i32_0 : i32, i32
  }
  func.func @transform_4(%arg0: i32) -> (i32, i32) {
    %c0_i32 = arith.constant 0 : i32
    %c0_i32_0 = arith.constant 0 : i32
    %c0_i32_1 = arith.constant 0 : i32
    return %c0_i32, %c0_i32_0 : i32, i32
  }
  func.func @transform_5(%arg0: i32) -> (i32, i32) {
    %c0_i32 = arith.constant 0 : i32
    %c0_i32_0 = arith.constant 0 : i32
    %c0_i32_1 = arith.constant 0 : i32
    return %c0_i32, %c0_i32_0 : i32, i32
  }
  func.func @transform_6(%arg0: i32) -> (i32, i32) {
    %c0_i32 = arith.constant 0 : i32
    %c0_i32_0 = arith.constant 0 : i32
    %c0_i32_1 = arith.constant 0 : i32
    return %c0_i32, %c0_i32_0 : i32, i32
  }
  func.func @transform_7(%arg0: i32) -> (i32, i32) {
    %c0_i32 = arith.constant 0 : i32
    %c0_i32_0 = arith.constant 0 : i32
    %c0_i32_1 = arith.constant 0 : i32
    return %c0_i32, %c0_i32_0 : i32, i32
  }
  func.func @transform_8(%arg0: i32) -> (i32, i32, i32) {
    %c0_i32 = arith.constant 0 : i32
    %c0_i32_0 = arith.constant 0 : i32
    %c0_i32_1 = arith.constant 0 : i32
    %c0_i32_2 = arith.constant 0 : i32
    return %c0_i32, %c0_i32_0, %c0_i32_1 : i32, i32, i32
  }
}

</mosaic_0001>

<llo_original>
// kernel: tpu_custom_call.1
$region0: #{tpu_custom_call.1}
  #allocation0 [shape = 'u32[]', space=smem, size = 0x4, offset = 0x4, fixed_abs, tag = 'smem constant byte address 0x4 - core index']
  #allocation1 [shape = 'u32[72,128]{1,0:T(1,128)}', space=vmem, size = 0x9000, scoped, tag = 'internal scratch']
  #allocation2 [shape = 'f32[8,8,128]{2,1,0:T(8,128)}', space=vmem, size = 0x8000, scoped, tag = 'scratch operand']
  #allocation3 [shape = 'f32[8,8,32]{2,1,0:T(8,128)}', space=vmem, size = 0x8000, scoped, tag = 'scratch operand']
  #allocation4 [shape = 'f32[8,8,32]{2,1,0:T(8,128)}', space=vmem, size = 0x8000, scoped, tag = 'scratch operand']
  %s0 = inlined_call_operand.hbm [shape: bf16[8,8,96], index: 0, kind: input, shape index: {}]
  %s1 = inlined_call_operand.hbm [shape: f32[8,32], index: 1, kind: input, shape index: {}]
  %s2 = inlined_call_operand.hbm [shape: f32[8,32], index: 2, kind: input, shape index: {}]
  %s3 = inlined_call_operand.hbm [shape: f32[32,128], index: 3, kind: input, shape index: {}]
  %s4 = inlined_call_operand.hbm [shape: bf16[96,128], index: 4, kind: input, shape index: {}]
  %s5 = inlined_call_operand.vmem [shape: f32[1,128], index: 5, kind: input, shape index: {}]
  %s6 = inlined_call_operand.hbm [shape: f32[32,64], index: 6, kind: input, shape index: {}]
  %s7 = inlined_call_operand.vmem [shape: f32[1,64], index: 7, kind: input, shape index: {}]
  %s8 = inlined_call_operand.hbm [shape: f32[8,8,128], index: 8, kind: output, shape index: {}]
  %s9 = sld [smem:[#allocation0]]
  $region66: #{tpu_custom_call.1} parent=0
    _
  %s11 = ssub.s32 1, %s9
  %s12 = scalar_select 0, %s11, %s9
  $region1: #{tpu_custom_call.1} parent=0
    #allocation5 [shape = 'u8[16384]{0}', space=vmem, size = 0x4000, scoped, tag = 'input window, operand 0, single buffered']
    #allocation6 [shape = 's32[1]{0}', space=sflag, size = 0x4, scoped, tag = 'scoped memory for tpu_custom_call.1']
    #allocation7 [shape = 's32[1]{0}', space=sflag, size = 0x4, scoped, tag = 'scoped memory for tpu_custom_call.1']
    #allocation8 [shape = 'u8[4096]{0}', space=vmem, size = 0x1000, scoped, tag = 'input window, operand 1, single buffered']
    #allocation9 [shape = 's32[1]{0}', space=sflag, size = 0x4, scoped, tag = 'scoped memory for tpu_custom_call.1']
    #allocation10 [shape = 'u8[4096]{0}', space=vmem, size = 0x1000, scoped, tag = 'input window, operand 2, single buffered']
    #allocation11 [shape = 'u8[16384]{0}', space=vmem, size = 0x4000, scoped, tag = 'input window, operand 3, single buffered']
    #allocation12 [shape = 's32[1]{0}', space=sflag, size = 0x4, scoped, tag = 'scoped memory for tpu_custom_call.1']
    #allocation13 [shape = 'u8[24576]{0}', space=vmem, size = 0x6000, scoped, tag = 'input window, operand 4, single buffered']
    #allocation14 [shape = 'u8[16384]{0}', space=vmem, size = 0x4000, scoped, tag = 'input window, operand 6, single buffered']
    #allocation15 [shape = 's32[1]{0}', space=sflag, size = 0x4, scoped, tag = 'scoped memory for tpu_custom_call.1']
    #allocation16 [shape = 'u8[32768]{0}', space=vmem, size = 0x8000, scoped, tag = 'output window, operand 0, single buffered']
    %13 = vsyncpa [#allocation6], 0
    %14 = vsyncpa [#allocation9], 0
    %15 = vsyncpa [#allocation12], 0
    %16 = vsyncpa [#allocation15], 0
    %17 = vsyncpa [#allocation7], 0
    // Predicated region
    $region2: #{tpu_custom_call.1} parent=1 // pred_check
      _
    $region3: #{tpu_custom_call.1} parent=1 // pred_check_branch
      %19 = sbr.rel (0) target = $region5
    $region4: #{tpu_custom_call.1} parent=1 // pred_region
      %21 = vsyncadd [#allocation6], 0
      %s22 = sshll.u32 %s0, 4
      %s23 = int_to_ptr.hbm [resolvable:$true] %s22
      %s24 = sshll.u32 [#allocation5], 4
      %s25 = int_to_ptr.vmem [resolvable:$true] %s24
      %30 = dma.hbm_to_vmem [thread:$0]  %s23, 512, %s25, [#allocation6], 64, 64, 4
    $region5: #{tpu_custom_call.1} parent=1 // pred_fallthru
      _
    // Predicated region
    $region6: #{tpu_custom_call.1} parent=1 // pred_check
      _
    $region7: #{tpu_custom_call.1} parent=1 // pred_check_branch
      %32 = sbr.rel (0) target = $region9
    $region8: #{tpu_custom_call.1} parent=1 // pred_region
      %34 = vsyncadd [#allocation9], 0
      %s36 = sshll.u32 %s1, 4
      %s37 = int_to_ptr.hbm [resolvable:$true] %s36
      %s38 = sshll.u32 [#allocation8], 4
      %s39 = int_to_ptr.vmem [resolvable:$true] %s38
      %41 = dma.hbm_to_vmem [thread:$0]  %s37, 128, %s39, [#allocation9]
    $region9: #{tpu_custom_call.1} parent=1 // pred_fallthru
      _
    // Predicated region
    $region10: #{tpu_custom_call.1} parent=1 // pred_check
      _
    $region11: #{tpu_custom_call.1} parent=1 // pred_check_branch
      %43 = sbr.rel (0) target = $region13
    $region12: #{tpu_custom_call.1} parent=1 // pred_region
      %45 = vsyncadd [#allocation9], 0
      %s47 = sshll.u32 %s2, 4
      %s48 = int_to_ptr.hbm [resolvable:$true] %s47
      %s49 = sshll.u32 [#allocation10], 4
      %s50 = int_to_ptr.vmem [resolvable:$true] %s49
      %52 = dma.hbm_to_vmem [thread:$0]  %s48, 128, %s50, [#allocation9]
    $region13: #{tpu_custom_call.1} parent=1 // pred_fallthru
      _
    // Predicated region
    $region14: #{tpu_custom_call.1} parent=1 // pred_check
      _
    $region15: #{tpu_custom_call.1} parent=1 // pred_check_branch
      %54 = sbr.rel (0) target = $region17
    $region16: #{tpu_custom_call.1} parent=1 // pred_region
      %56 = vsyncadd [#allocation12], 0
      %s57 = sshll.u32 %s3, 4
      %s58 = int_to_ptr.hbm [resolvable:$true] %s57
      %s59 = sshll.u32 [#allocation11], 4
      %s60 = int_to_ptr.vmem [resolvable:$true] %s59
      %65 = dma.hbm_to_vmem [thread:$0]  %s58, 512, %s60, [#allocation12], 128, 128, 8
    $region17: #{tpu_custom_call.1} parent=1 // pred_fallthru
      _
    // Predicated region
    $region18: #{tpu_custom_call.1} parent=1 // pred_check
      _
    $region19: #{tpu_custom_call.1} parent=1 // pred_check_branch
      %67 = sbr.rel (0) target = $region21
    $region20: #{tpu_custom_call.1} parent=1 // pred_region
      %69 = vsyncadd [#allocation12], 0
      %s70 = sshll.u32 %s4, 4
      %s71 = int_to_ptr.hbm [resolvable:$true] %s70
      %s72 = sshll.u32 [#allocation13], 4
      %s73 = int_to_ptr.vmem [resolvable:$true] %s72
      %78 = dma.hbm_to_vmem [thread:$0]  %s71, 768, %s73, [#allocation12], 64, 64, 4
    $region21: #{tpu_custom_call.1} parent=1 // pred_fallthru
      _
    // Predicated region
    $region22: #{tpu_custom_call.1} parent=1 // pred_check
      _
    $region23: #{tpu_custom_call.1} parent=1 // pred_check_branch
      %80 = sbr.rel (0) target = $region25
    $region24: #{tpu_custom_call.1} parent=1 // pred_region
      _
    $region25: #{tpu_custom_call.1} parent=1 // pred_fallthru
      _
    // Predicated region
    $region26: #{tpu_custom_call.1} parent=1 // pred_check
      _
    $region27: #{tpu_custom_call.1} parent=1 // pred_check_branch
      %82 = sbr.rel (0) target = $region29
    $region28: #{tpu_custom_call.1} parent=1 // pred_region
      %84 = vsyncadd [#allocation15], 0
      %s85 = sshll.u32 %s6, 4
      %s86 = int_to_ptr.hbm [resolvable:$true] %s85
      %s87 = sshll.u32 [#allocation14], 4
      %s88 = int_to_ptr.vmem [resolvable:$true] %s87
      %93 = dma.hbm_to_vmem [thread:$0]  %s86, 512, %s88, [#allocation15], 128, 128, 8
    $region29: #{tpu_custom_call.1} parent=1 // pred_fallthru
      _
    // Predicated region
    $region30: #{tpu_custom_call.1} parent=1 // pred_check
      _
    $region31: #{tpu_custom_call.1} parent=1 // pred_check_branch
      %95 = sbr.rel (0) target = $region33
    $region32: #{tpu_custom_call.1} parent=1 // pred_region
      _
    $region33: #{tpu_custom_call.1} parent=1 // pred_fallthru
      _
    // Predicated region
    $region34: #{tpu_custom_call.1} parent=1 // pred_check
      _
    $region35: #{tpu_custom_call.1} parent=1 // pred_check_branch
      %97 = sbr.rel (0) target = $region37
    $region36: #{tpu_custom_call.1} parent=1 // pred_region
      %99 = dma.done [#allocation6], 512
    $region37: #{tpu_custom_call.1} parent=1 // pred_fallthru
      _
    // Predicated region
    $region38: #{tpu_custom_call.1} parent=1 // pred_check
      _
    $region39: #{tpu_custom_call.1} parent=1 // pred_check_branch
      %101 = sbr.rel (0) target = $region41
    $region40: #{tpu_custom_call.1} parent=1 // pred_region
      %103 = dma.done [#allocation9], 128
    $region41: #{tpu_custom_call.1} parent=1 // pred_fallthru
      _
    // Predicated region
    $region42: #{tpu_custom_call.1} parent=1 // pred_check
      _
    $region43: #{tpu_custom_call.1} parent=1 // pred_check_branch
      %105 = sbr.rel (0) target = $region45
    $region44: #{tpu_custom_call.1} parent=1 // pred_region
      %107 = dma.done [#allocation9], 128
    $region45: #{tpu_custom_call.1} parent=1 // pred_fallthru
      _
    // Predicated region
    $region46: #{tpu_custom_call.1} parent=1 // pred_check
      _
    $region47: #{tpu_custom_call.1} parent=1 // pred_check_branch
      %109 = sbr.rel (0) target = $region49
    $region48: #{tpu_custom_call.1} parent=1 // pred_region
      %111 = dma.done [#allocation12], 512
    $region49: #{tpu_custom_call.1} parent=1 // pred_fallthru
      _
    // Predicated region
    $region50: #{tpu_custom_call.1} parent=1 // pred_check
      _
    $region51: #{tpu_custom_call.1} parent=1 // pred_check_branch
      %113 = sbr.rel (0) target = $region53
    $region52: #{tpu_custom_call.1} parent=1 // pred_region
      %115 = dma.done [#allocation12], 768
    $region53: #{tpu_custom_call.1} parent=1 // pred_fallthru
      _
    // Predicated region
    $region54: #{tpu_custom_call.1} parent=1 // pred_check
      _
    $region55: #{tpu_custom_call.1} parent=1 // pred_check_branch
      %117 = sbr.rel (0) target = $region57
    $region56: #{tpu_custom_call.1} parent=1 // pred_region
      %119 = dma.done [#allocation15], 512
    $region57: #{tpu_custom_call.1} parent=1 // pred_fallthru
      _
    %v121 = vld [vmem:[#allocation5] sm:$0xf]
    %v122 = vld [vmem:[#allocation5 + $0x4] sm:$0xf]
    %v123 = vld [vmem:[#allocation5 + $0x8] sm:$0xf]
    %v124 = vld [vmem:[#allocation5 + $0xc] sm:$0xf]
    %v125 = vld [vmem:[#allocation5 + $0x10] sm:$0xf]
    %v126 = vld [vmem:[#allocation5 + $0x14] sm:$0xf]
    %v127 = vld [vmem:[#allocation5 + $0x18] sm:$0xf]
    %v128 = vld [vmem:[#allocation5 + $0x1c] sm:$0xf]
    %v129 = vld [vmem:[#allocation13] sm:$0xf]
    %v130 = vld [vmem:[#allocation13 + $0x4] sm:$0xf]
    %v131 = vld [vmem:[#allocation13 + $0x8] sm:$0xf]
    %v132 = vld [vmem:[#allocation13 + $0xc] sm:$0xf]
    %v133 = vld [vmem:[#allocation13 + $0x10] sm:$0xf]
    %v134 = vld [vmem:[#allocation13 + $0x14] sm:$0xf]
    %v135 = vld [vmem:[#allocation13 + $0x18] sm:$0xf]
    %v136 = vld [vmem:[#allocation13 + $0x1c] sm:$0xf]
    %v137 = vld [vmem:[#allocation13 + $0x20] sm:$0xf]
    %v138 = vld [vmem:[#allocation13 + $0x24] sm:$0xf]
    %v139 = vld [vmem:[#allocation13 + $0x28] sm:$0xf]
    %v140 = vld [vmem:[#allocation13 + $0x2c] sm:$0xf]
    %v141 = vld [vmem:[%s5] sm:$0x1]
    %v143 = vperm.slane %v141, 0
    %v153 = vunpack.c.l.b16 %v121
    %v154 = vunpack.c.l.b16 %v122
    %v155 = vunpack.c.l.b16 %v123
    %v156 = vunpack.c.l.b16 %v124
    %v157 = vunpack.c.l.b16 %v125
    %v158 = vunpack.c.l.b16 %v126
    %v159 = vunpack.c.l.b16 %v127
    %v160 = vunpack.c.l.b16 %v128
    %v161 = vpack.c.b16 %v154, %v153
    %v162 = vpack.c.b16 %v156, %v155
    %v163 = vpack.c.b16 %v158, %v157
    %v164 = vpack.c.b16 %v160, %v159
    %v177 = vunpack.c.l.b16 %v129
    %v178 = vunpack.c.l.b16 %v130
    %v179 = vunpack.c.l.b16 %v131
    %v180 = vunpack.c.l.b16 %v132
    %v181 = vunpack.c.l.b16 %v133
    %v182 = vunpack.c.l.b16 %v134
    %v183 = vunpack.c.l.b16 %v135
    %v184 = vunpack.c.l.b16 %v136
    %v185 = vunpack.c.l.b16 %v137
    %v186 = vunpack.c.l.b16 %v138
    %v187 = vunpack.c.l.b16 %v139
    %v188 = vunpack.c.l.b16 %v140
    %v189 = vpack.c.b16 %v178, %v177
    %v190 = vpack.c.b16 %v180, %v179
    %v191 = vpack.c.b16 %v182, %v181
    %v192 = vpack.c.b16 %v184, %v183
    %v193 = vpack.c.b16 %v186, %v185
    %v194 = vpack.c.b16 %v188, %v187
    %vm201 = vcmask 785408
    %v203 = vsel %vm201, %v161, 0
    %v206 = vsel %vm201, %v162, 0
    %v209 = vsel %vm201, %v163, 0
    %v212 = vsel %vm201, %v164, 0
    %214 = vmatpush.bf16.msra.mxu0 0
    %215 = vmatpush.bf16.msra.mxu0 0
    %216 = vmatpush.bf16.msra.mxu0 %v194
    %217 = vmatpush.bf16.msra.mxu0 %v193
    %218 = vmatpush.bf16.msra.mxu0 %v192
    %219 = vmatpush.bf16.msra.mxu0 %v191
    %220 = vmatpush.bf16.msra.mxu0 %v190
    %221 = vmatpush.bf16.msra.mxu0 %v189
    %222 = vmatmul.bf16.gmra.mxu0 %v203
    %v223 = vpop.f32.mrf.mxu0
    %v224 = vadd.f32 %v143, %v223
    %v225 = vpop.f32.mrf.mxu0
    %v226 = vadd.f32 %v143, %v225
    %227 = vmatmul.bf16.gmra.mxu0 %v206
    %v228 = vpop.f32.mrf.mxu0
    %v229 = vadd.f32 %v143, %v228
    %v230 = vpop.f32.mrf.mxu0
    %v231 = vadd.f32 %v143, %v230
    %232 = vmatmul.bf16.gmra.mxu0 %v209
    %v233 = vpop.f32.mrf.mxu0
    %v234 = vadd.f32 %v143, %v233
    %v235 = vpop.f32.mrf.mxu0
    %v236 = vadd.f32 %v143, %v235
    %237 = vmatmul.bf16.gmra.mxu0 %v212
    %v238 = vpop.f32.mrf.mxu0
    %v239 = vadd.f32 %v143, %v238
    %v240 = vpop.f32.mrf.mxu0
    %v241 = vadd.f32 %v143, %v240
    %242 = vdwg.mxu0
    %243 = vst [vmem:[#allocation2] sm:$0xff] %v224
    %244 = vst [vmem:[#allocation2 + $0x8] sm:$0xff] %v226
    %245 = vst [vmem:[#allocation2 + $0x10] sm:$0xff] %v229
    %246 = vst [vmem:[#allocation2 + $0x18] sm:$0xff] %v231
    %247 = vst [vmem:[#allocation2 + $0x20] sm:$0xff] %v234
    %248 = vst [vmem:[#allocation2 + $0x28] sm:$0xff] %v236
    %249 = vst [vmem:[#allocation2 + $0x30] sm:$0xff] %v239
    %250 = vst [vmem:[#allocation2 + $0x38] sm:$0xff] %v241
    %v251 = vld [vmem:[#allocation11] sm:$0xff]
    %v252 = vld [vmem:[#allocation11 + $0x8] sm:$0xff]
    %v253 = vld [vmem:[#allocation11 + $0x10] sm:$0xff]
    %v254 = vld [vmem:[#allocation11 + $0x18] sm:$0xff]
    %v255 = vld [vmem:[#allocation8] sm:$0xff]
    %v256 = vld [vmem:[#allocation10] sm:$0xff]
    %v257 = vld [vmem:[#allocation2] sm:$0xff]
    %vm258 = vcmask 261120
    %v260 = vsel %vm258, %v255, 0
    %262 = vmatpush.msra.mxu0 0.0
    %263 = vmatpush.msra.mxu0 0.0
    %264 = vmatpush.msra.mxu0 0.0
    %265 = vmatpush.msra.mxu0 0.0
    %266 = vmatpush.msra.mxu0 0.0
    %267 = vmatpush.msra.mxu0 0.0
    %268 = vmatpush.msra.mxu0 0.0
    %269 = vmatpush.msra.mxu0 0.0
    %270 = vmatpush.msra.mxu0 0.0
    %271 = vmatpush.msra.mxu0 0.0
    %272 = vmatpush.msra.mxu0 0.0
    %273 = vmatpush.msra.mxu0 0.0
    %274 = vmatpush.msra.mxu0 %v254
    %275 = vmatpush.msra.mxu0 %v253
    %276 = vmatpush.msra.mxu0 %v252
    %277 = vmatpush.msra.mxu0 %v251
    %278 = vmatmul.f32.gmra.mxu0 %v260
    %v279 = vpop.f32.mrf.mxu0
    %v280 = vadd.f32 %v257, %v279
    %281 = vdwg.mxu0
    %v282 = vxor.u32 %v280, 2147483648
    %v283 = vmul.f32 %v282, 1.442695
    %v284 = vpow.pop %v283
    %v285 = vadd.f32 %v284, 1.0
    %v286 = vrcp.pop %v285
    %v287 = vmul.f32 %v285, %v286
    %v288 = vsub.f32 1.0, %v287
    %v289 = vmul.f32 %v286, %v288
    %v290 = vadd.f32 %v286, %v289
    %vm291 = vweird.f32 %v285
    %vm292 = vweird.f32 %v286
    %vm293 = vmor %vm291, %vm292
    %v294 = vsel %vm293, %v286, %v290
    %v295 = vand.u32 2147483647, %v285
    %vm296 = vcmp.eq.f32.partialorder %v295, 8.507059e+37
    %v297 = vand.u32 %v285, 2147483648
    %v298 = vor.u32 1.1754944e-38, %v297
    %v299 = vsel %vm296, %v298, %v294
    %v300 = vmul.f32 1.0, %v299
    %v301 = vtanh.pop %v280
    %303 = vrot.lane.b32.xlu0 %v300, 96
    %v304 = vpop.permute.xlu0 %303
    %v306 = vmul.f32 %v256, %v304
    %308 = vrot.lane.b32.xlu0 %v301, 32
    %v309 = vpop.permute.xlu0 %308
    %v311 = vmul.f32 %v300, %v309
    %v312 = vadd.f32 %v306, %v311
    %v313 = vtanh.pop %v312
    %315 = vrot.lane.b32.xlu0 %v313, 64
    %v316 = vpop.permute.xlu0 %315
    %v318 = vmul.f32 %v300, %v316
    %320 = vrot.lane.b32.xlu0 %v318, 64
    %v321 = vpop.permute.xlu0 %320
    %323 = vst.msk [vmem:[#allocation3] sm:$0xff] %vm258, %v321
    %324 = vst.msk [vmem:[#allocation4] sm:$0xff] %vm258, %v312
    %s325 = scalar_lea.vmem [#allocation2], 8
    %v326 = vld [vmem:[%s325] sm:$0xff]
    %v327 = vsel %vm258, %v321, 0
    %329 = vmatpush.msra.mxu0 0.0
    %330 = vmatpush.msra.mxu0 0.0
    %331 = vmatpush.msra.mxu0 0.0
    %332 = vmatpush.msra.mxu0 0.0
    %333 = vmatpush.msra.mxu0 0.0
    %334 = vmatpush.msra.mxu0 0.0
    %335 = vmatpush.msra.mxu0 0.0
    %336 = vmatpush.msra.mxu0 0.0
    %337 = vmatpush.msra.mxu0 0.0
    %338 = vmatpush.msra.mxu0 0.0
    %339 = vmatpush.msra.mxu0 0.0
    %340 = vmatpush.msra.mxu0 0.0
    %341 = vmatpush.msra.mxu0 %v254
    %342 = vmatpush.msra.mxu0 %v253
    %343 = vmatpush.msra.mxu0 %v252
    %344 = vmatpush.msra.mxu0 %v251
    %345 = vmatmul.f32.gmra.mxu0 %v327
    %v346 = vpop.f32.mrf.mxu0
    %v347 = vadd.f32 %v326, %v346
    %348 = vdwg.mxu0
    %v349 = vxor.u32 %v347, 2147483648
    %v350 = vmul.f32 %v349, 1.442695
    %v351 = vpow.pop %v350
    %v352 = vadd.f32 %v351, 1.0
    %v353 = vrcp.pop %v352
    %v354 = vmul.f32 %v352, %v353
    %v355 = vsub.f32 1.0, %v354
    %v356 = vmul.f32 %v353, %v355
    %v357 = vadd.f32 %v353, %v356
    %vm358 = vweird.f32 %v352
    %vm359 = vweird.f32 %v353
    %vm360 = vmor %vm358, %vm359
    %v361 = vsel %vm360, %v353, %v357
    %v362 = vand.u32 2147483647, %v352
    %vm363 = vcmp.eq.f32.partialorder %v362, 8.507059e+37
    %v364 = vand.u32 %v352, 2147483648
    %v365 = vor.u32 1.1754944e-38, %v364
    %v366 = vsel %vm363, %v365, %v361
    %v367 = vmul.f32 1.0, %v366
    %v368 = vtanh.pop %v347
    %370 = vrot.lane.b32.xlu0 %v367, 96
    %v371 = vpop.permute.xlu0 %370
    %v373 = vmul.f32 %v312, %v371
    %375 = vrot.lane.b32.xlu0 %v368, 32
    %v376 = vpop.permute.xlu0 %375
    %v378 = vmul.f32 %v367, %v376
    %v379 = vadd.f32 %v373, %v378
    %v380 = vtanh.pop %v379
    %382 = vrot.lane.b32.xlu0 %v380, 64
    %v383 = vpop.permute.xlu0 %382
    %v385 = vmul.f32 %v367, %v383
    %387 = vrot.lane.b32.xlu0 %v385, 64
    %v388 = vpop.permute.xlu0 %387
    %s390 = scalar_lea.vmem [#allocation3], 8
    %391 = vst.msk [vmem:[%s390] sm:$0xff] %vm258, %v388
    %s392 = scalar_lea.vmem [#allocation4], 8
    %393 = vst.msk [vmem:[%s392] sm:$0xff] %vm258, %v379
    %s394 = scalar_lea.vmem [#allocation2], 16
    %v395 = vld [vmem:[%s394] sm:$0xff]
    %v396 = vsel %vm258, %v388, 0
    %398 = vmatpush.msra.mxu0 0.0
    %399 = vmatpush.msra.mxu0 0.0
    %400 = vmatpush.msra.mxu0 0.0
    %401 = vmatpush.msra.mxu0 0.0
    %402 = vmatpush.msra.mxu0 0.0
    %403 = vmatpush.msra.mxu0 0.0
    %404 = vmatpush.msra.mxu0 0.0
    %405 = vmatpush.msra.mxu0 0.0
    %406 = vmatpush.msra.mxu0 0.0
    %407 = vmatpush.msra.mxu0 0.0
    %408 = vmatpush.msra.mxu0 0.0
    %409 = vmatpush.msra.mxu0 0.0
    %410 = vmatpush.msra.mxu0 %v254
    %411 = vmatpush.msra.mxu0 %v253
    %412 = vmatpush.msra.mxu0 %v252
    %413 = vmatpush.msra.mxu0 %v251
    %414 = vmatmul.f32.gmra.mxu0 %v396
    %v415 = vpop.f32.mrf.mxu0
    %v416 = vadd.f32 %v395, %v415
    %417 = vdwg.mxu0
    %v418 = vxor.u32 %v416, 2147483648
    %v419 = vmul.f32 %v418, 1.442695
    %v420 = vpow.pop %v419
    %v421 = vadd.f32 %v420, 1.0
    %v422 = vrcp.pop %v421
    %v423 = vmul.f32 %v421, %v422
    %v424 = vsub.f32 1.0, %v423
    %v425 = vmul.f32 %v422, %v424
    %v426 = vadd.f32 %v422, %v425
    %vm427 = vweird.f32 %v421
    %vm428 = vweird.f32 %v422
    %vm429 = vmor %vm427, %vm428
    %v430 = vsel %vm429, %v422, %v426
    %v431 = vand.u32 2147483647, %v421
    %vm432 = vcmp.eq.f32.partialorder %v431, 8.507059e+37
    %v433 = vand.u32 %v421, 2147483648
    %v434 = vor.u32 1.1754944e-38, %v433
    %v435 = vsel %vm432, %v434, %v430
    %v436 = vmul.f32 1.0, %v435
    %v437 = vtanh.pop %v416
    %439 = vrot.lane.b32.xlu0 %v436, 96
    %v440 = vpop.permute.xlu0 %439
    %v442 = vmul.f32 %v379, %v440
    %444 = vrot.lane.b32.xlu0 %v437, 32
    %v445 = vpop.permute.xlu0 %444
    %v447 = vmul.f32 %v436, %v445
    %v448 = vadd.f32 %v442, %v447
    %v449 = vtanh.pop %v448
    %451 = vrot.lane.b32.xlu0 %v449, 64
    %v452 = vpop.permute.xlu0 %451
    %v454 = vmul.f32 %v436, %v452
    %456 = vrot.lane.b32.xlu0 %v454, 64
    %v457 = vpop.permute.xlu0 %456
    %s459 = scalar_lea.vmem [#allocation3], 16
    %460 = vst.msk [vmem:[%s459] sm:$0xff] %vm258, %v457
    %s461 = scalar_lea.vmem [#allocation4], 16
    %462 = vst.msk [vmem:[%s461] sm:$0xff] %vm258, %v448
    %s463 = scalar_lea.vmem [#allocation2], 24
    %v464 = vld [vmem:[%s463] sm:$0xff]
    %v465 = vsel %vm258, %v457, 0
    %467 = vmatpush.msra.mxu0 0.0
    %468 = vmatpush.msra.mxu0 0.0
    %469 = vmatpush.msra.mxu0 0.0
    %470 = vmatpush.msra.mxu0 0.0
    %471 = vmatpush.msra.mxu0 0.0
    %472 = vmatpush.msra.mxu0 0.0
    %473 = vmatpush.msra.mxu0 0.0
    %474 = vmatpush.msra.mxu0 0.0
    %475 = vmatpush.msra.mxu0 0.0
    %476 = vmatpush.msra.mxu0 0.0
    %477 = vmatpush.msra.mxu0 0.0
    %478 = vmatpush.msra.mxu0 0.0
    %479 = vmatpush.msra.mxu0 %v254
    %480 = vmatpush.msra.mxu0 %v253
    %481 = vmatpush.msra.mxu0 %v252
    %482 = vmatpush.msra.mxu0 %v251
    %483 = vmatmul.f32.gmra.mxu0 %v465
    %v484 = vpop.f32.mrf.mxu0
    %v485 = vadd.f32 %v464, %v484
    %486 = vdwg.mxu0
    %v487 = vxor.u32 %v485, 2147483648
    %v488 = vmul.f32 %v487, 1.442695
    %v489 = vpow.pop %v488
    %v490 = vadd.f32 %v489, 1.0
    %v491 = vrcp.pop %v490
    %v492 = vmul.f32 %v490, %v491
    %v493 = vsub.f32 1.0, %v492
    %v494 = vmul.f32 %v491, %v493
    %v495 = vadd.f32 %v491, %v494
    %vm496 = vweird.f32 %v490
    %vm497 = vweird.f32 %v491
    %vm498 = vmor %vm496, %vm497
    %v499 = vsel %vm498, %v491, %v495
    %v500 = vand.u32 2147483647, %v490
    %vm501 = vcmp.eq.f32.partialorder %v500, 8.507059e+37
    %v502 = vand.u32 %v490, 2147483648
    %v503 = vor.u32 1.1754944e-38, %v502
    %v504 = vsel %vm501, %v503, %v499
    %v505 = vmul.f32 1.0, %v504
    %v506 = vtanh.pop %v485
    %508 = vrot.lane.b32.xlu0 %v505, 96
    %v509 = vpop.permute.xlu0 %508
    %v511 = vmul.f32 %v448, %v509
    %513 = vrot.lane.b32.xlu0 %v506, 32
    %v514 = vpop.permute.xlu0 %513
    %v516 = vmul.f32 %v505, %v514
    %v517 = vadd.f32 %v511, %v516
    %v518 = vtanh.pop %v517
    %520 = vrot.lane.b32.xlu0 %v518, 64
    %v521 = vpop.permute.xlu0 %520
    %v523 = vmul.f32 %v505, %v521
    %525 = vrot.lane.b32.xlu0 %v523, 64
    %v526 = vpop.permute.xlu0 %525
    %s528 = scalar_lea.vmem [#allocation3], 24
    %529 = vst.msk [vmem:[%s528] sm:$0xff] %vm258, %v526
    %s530 = scalar_lea.vmem [#allocation4], 24
    %531 = vst.msk [vmem:[%s530] sm:$0xff] %vm258, %v517
    %s532 = scalar_lea.vmem [#allocation2], 32
    %v533 = vld [vmem:[%s532] sm:$0xff]
    %v534 = vsel %vm258, %v526, 0
    %536 = vmatpush.msra.mxu0 0.0
    %537 = vmatpush.msra.mxu0 0.0
    %538 = vmatpush.msra.mxu0 0.0
    %539 = vmatpush.msra.mxu0 0.0
    %540 = vmatpush.msra.mxu0 0.0
    %541 = vmatpush.msra.mxu0 0.0
    %542 = vmatpush.msra.mxu0 0.0
    %543 = vmatpush.msra.mxu0 0.0
    %544 = vmatpush.msra.mxu0 0.0
    %545 = vmatpush.msra.mxu0 0.0
    %546 = vmatpush.msra.mxu0 0.0
    %547 = vmatpush.msra.mxu0 0.0
    %548 = vmatpush.msra.mxu0 %v254
    %549 = vmatpush.msra.mxu0 %v253
    %550 = vmatpush.msra.mxu0 %v252
    %551 = vmatpush.msra.mxu0 %v251
    %552 = vmatmul.f32.gmra.mxu0 %v534
    %v553 = vpop.f32.mrf.mxu0
    %v554 = vadd.f32 %v533, %v553
    %555 = vdwg.mxu0
    %v556 = vxor.u32 %v554, 2147483648
    %v557 = vmul.f32 %v556, 1.442695
    %v558 = vpow.pop %v557
    %v559 = vadd.f32 %v558, 1.0
    %v560 = vrcp.pop %v559
    %v561 = vmul.f32 %v559, %v560
    %v562 = vsub.f32 1.0, %v561
    %v563 = vmul.f32 %v560, %v562
    %v564 = vadd.f32 %v560, %v563
    %vm565 = vweird.f32 %v559
    %vm566 = vweird.f32 %v560
    %vm567 = vmor %vm565, %vm566
    %v568 = vsel %vm567, %v560, %v564
    %v569 = vand.u32 2147483647, %v559
    %vm570 = vcmp.eq.f32.partialorder %v569, 8.507059e+37
    %v571 = vand.u32 %v559, 2147483648
    %v572 = vor.u32 1.1754944e-38, %v571
    %v573 = vsel %vm570, %v572, %v568
    %v574 = vmul.f32 1.0, %v573
    %v575 = vtanh.pop %v554
    %577 = vrot.lane.b32.xlu0 %v574, 96
    %v578 = vpop.permute.xlu0 %577
    %v580 = vmul.f32 %v517, %v578
    %582 = vrot.lane.b32.xlu0 %v575, 32
    %v583 = vpop.permute.xlu0 %582
    %v585 = vmul.f32 %v574, %v583
    %v586 = vadd.f32 %v580, %v585
    %v587 = vtanh.pop %v586
    %589 = vrot.lane.b32.xlu0 %v587, 64
    %v590 = vpop.permute.xlu0 %589
    %v592 = vmul.f32 %v574, %v590
    %594 = vrot.lane.b32.xlu0 %v592, 64
    %v595 = vpop.permute.xlu0 %594
    %s597 = scalar_lea.vmem [#allocation3], 32
    %598 = vst.msk [vmem:[%s597] sm:$0xff] %vm258, %v595
    %s599 = scalar_lea.vmem [#allocation4], 32
    %600 = vst.msk [vmem:[%s599] sm:$0xff] %vm258, %v586
    %s601 = scalar_lea.vmem [#allocation2], 40
    %v602 = vld [vmem:[%s601] sm:$0xff]
    %v603 = vsel %vm258, %v595, 0
    %605 = vmatpush.msra.mxu0 0.0
    %606 = vmatpush.msra.mxu0 0.0
    %607 = vmatpush.msra.mxu0 0.0
    %608 = vmatpush.msra.mxu0 0.0
    %609 = vmatpush.msra.mxu0 0.0
    %610 = vmatpush.msra.mxu0 0.0
    %611 = vmatpush.msra.mxu0 0.0
    %612 = vmatpush.msra.mxu0 0.0
    %613 = vmatpush.msra.mxu0 0.0
    %614 = vmatpush.msra.mxu0 0.0
    %615 = vmatpush.msra.mxu0 0.0
    %616 = vmatpush.msra.mxu0 0.0
    %617 = vmatpush.msra.mxu0 %v254
    %618 = vmatpush.msra.mxu0 %v253
    %619 = vmatpush.msra.mxu0 %v252
    %620 = vmatpush.msra.mxu0 %v251
    %621 = vmatmul.f32.gmra.mxu0 %v603
    %v622 = vpop.f32.mrf.mxu0
    %v623 = vadd.f32 %v602, %v622
    %624 = vdwg.mxu0
    %v625 = vxor.u32 %v623, 2147483648
    %v626 = vmul.f32 %v625, 1.442695
    %v627 = vpow.pop %v626
    %v628 = vadd.f32 %v627, 1.0
    %v629 = vrcp.pop %v628
    %v630 = vmul.f32 %v628, %v629
    %v631 = vsub.f32 1.0, %v630
    %v632 = vmul.f32 %v629, %v631
    %v633 = vadd.f32 %v629, %v632
    %vm634 = vweird.f32 %v628
    %vm635 = vweird.f32 %v629
    %vm636 = vmor %vm634, %vm635
    %v637 = vsel %vm636, %v629, %v633
    %v638 = vand.u32 2147483647, %v628
    %vm639 = vcmp.eq.f32.partialorder %v638, 8.507059e+37
    %v640 = vand.u32 %v628, 2147483648
    %v641 = vor.u32 1.1754944e-38, %v640
    %v642 = vsel %vm639, %v641, %v637
    %v643 = vmul.f32 1.0, %v642
    %v644 = vtanh.pop %v623
    %646 = vrot.lane.b32.xlu0 %v643, 96
    %v647 = vpop.permute.xlu0 %646
    %v649 = vmul.f32 %v586, %v647
    %651 = vrot.lane.b32.xlu0 %v644, 32
    %v652 = vpop.permute.xlu0 %651
    %v654 = vmul.f32 %v643, %v652
    %v655 = vadd.f32 %v649, %v654
    %v656 = vtanh.pop %v655
    %658 = vrot.lane.b32.xlu0 %v656, 64
    %v659 = vpop.permute.xlu0 %658
    %v661 = vmul.f32 %v643, %v659
    %663 = vrot.lane.b32.xlu0 %v661, 64
    %v664 = vpop.permute.xlu0 %663
    %s666 = scalar_lea.vmem [#allocation3], 40
    %667 = vst.msk [vmem:[%s666] sm:$0xff] %vm258, %v664
    %s668 = scalar_lea.vmem [#allocation4], 40
    %669 = vst.msk [vmem:[%s668] sm:$0xff] %vm258, %v655
    %s670 = scalar_lea.vmem [#allocation2], 48
    %v671 = vld [vmem:[%s670] sm:$0xff]
    %v672 = vsel %vm258, %v664, 0
    %674 = vmatpush.msra.mxu0 0.0
    %675 = vmatpush.msra.mxu0 0.0
    %676 = vmatpush.msra.mxu0 0.0
    %677 = vmatpush.msra.mxu0 0.0
    %678 = vmatpush.msra.mxu0 0.0
    %679 = vmatpush.msra.mxu0 0.0
    %680 = vmatpush.msra.mxu0 0.0
    %681 = vmatpush.msra.mxu0 0.0
    %682 = vmatpush.msra.mxu0 0.0
    %683 = vmatpush.msra.mxu0 0.0
    %684 = vmatpush.msra.mxu0 0.0
    %685 = vmatpush.msra.mxu0 0.0
    %686 = vmatpush.msra.mxu0 %v254
    %687 = vmatpush.msra.mxu0 %v253
    %688 = vmatpush.msra.mxu0 %v252
    %689 = vmatpush.msra.mxu0 %v251
    %690 = vmatmul.f32.gmra.mxu0 %v672
    %v691 = vpop.f32.mrf.mxu0
    %v692 = vadd.f32 %v671, %v691
    %693 = vdwg.mxu0
    %v694 = vxor.u32 %v692, 2147483648
    %v695 = vmul.f32 %v694, 1.442695
    %v696 = vpow.pop %v695
    %v697 = vadd.f32 %v696, 1.0
    %v698 = vrcp.pop %v697
    %v699 = vmul.f32 %v697, %v698
    %v700 = vsub.f32 1.0, %v699
    %v701 = vmul.f32 %v698, %v700
    %v702 = vadd.f32 %v698, %v701
    %vm703 = vweird.f32 %v697
    %vm704 = vweird.f32 %v698
    %vm705 = vmor %vm703, %vm704
    %v706 = vsel %vm705, %v698, %v702
    %v707 = vand.u32 2147483647, %v697
    %vm708 = vcmp.eq.f32.partialorder %v707, 8.507059e+37
    %v709 = vand.u32 %v697, 2147483648
    %v710 = vor.u32 1.1754944e-38, %v709
    %v711 = vsel %vm708, %v710, %v706
    %v712 = vmul.f32 1.0, %v711
    %v713 = vtanh.pop %v692
    %715 = vrot.lane.b32.xlu0 %v712, 96
    %v716 = vpop.permute.xlu0 %715
    %v718 = vmul.f32 %v655, %v716
    %720 = vrot.lane.b32.xlu0 %v713, 32
    %v721 = vpop.permute.xlu0 %720
    %v723 = vmul.f32 %v712, %v721
    %v724 = vadd.f32 %v718, %v723
    %v725 = vtanh.pop %v724
    %727 = vrot.lane.b32.xlu0 %v725, 64
    %v728 = vpop.permute.xlu0 %727
    %v730 = vmul.f32 %v712, %v728
    %732 = vrot.lane.b32.xlu0 %v730, 64
    %v733 = vpop.permute.xlu0 %732
    %s735 = scalar_lea.vmem [#allocation3], 48
    %736 = vst.msk [vmem:[%s735] sm:$0xff] %vm258, %v733
    %s737 = scalar_lea.vmem [#allocation4], 48
    %738 = vst.msk [vmem:[%s737] sm:$0xff] %vm258, %v724
    %s739 = scalar_lea.vmem [#allocation2], 56
    %v740 = vld [vmem:[%s739] sm:$0xff]
    %v741 = vsel %vm258, %v733, 0
    %743 = vmatpush.msra.mxu0 0.0
    %744 = vmatpush.msra.mxu0 0.0
    %745 = vmatpush.msra.mxu0 0.0
    %746 = vmatpush.msra.mxu0 0.0
    %747 = vmatpush.msra.mxu0 0.0
    %748 = vmatpush.msra.mxu0 0.0
    %749 = vmatpush.msra.mxu0 0.0
    %750 = vmatpush.msra.mxu0 0.0
    %751 = vmatpush.msra.mxu0 0.0
    %752 = vmatpush.msra.mxu0 0.0
    %753 = vmatpush.msra.mxu0 0.0
    %754 = vmatpush.msra.mxu0 0.0
    %755 = vmatpush.msra.mxu0 %v254
    %756 = vmatpush.msra.mxu0 %v253
    %757 = vmatpush.msra.mxu0 %v252
    %758 = vmatpush.msra.mxu0 %v251
    %759 = vmatmul.f32.gmra.mxu0 %v741
    %v760 = vpop.f32.mrf.mxu0
    %v761 = vadd.f32 %v740, %v760
    %762 = vdwg.mxu0
    %v763 = vxor.u32 %v761, 2147483648
    %v764 = vmul.f32 %v763, 1.442695
    %v765 = vpow.pop %v764
    %v766 = vadd.f32 %v765, 1.0
    %v767 = vrcp.pop %v766
    %v768 = vmul.f32 %v766, %v767
    %v769 = vsub.f32 1.0, %v768
    %v770 = vmul.f32 %v767, %v769
    %v771 = vadd.f32 %v767, %v770
    %vm772 = vweird.f32 %v766
    %vm773 = vweird.f32 %v767
    %vm774 = vmor %vm772, %vm773
    %v775 = vsel %vm774, %v767, %v771
    %v776 = vand.u32 2147483647, %v766
    %vm777 = vcmp.eq.f32.partialorder %v776, 8.507059e+37
    %v778 = vand.u32 %v766, 2147483648
    %v779 = vor.u32 1.1754944e-38, %v778
    %v780 = vsel %vm777, %v779, %v775
    %v781 = vmul.f32 1.0, %v780
    %v782 = vtanh.pop %v761
    %784 = vrot.lane.b32.xlu0 %v781, 96
    %v785 = vpop.permute.xlu0 %784
    %v787 = vmul.f32 %v724, %v785
    %789 = vrot.lane.b32.xlu0 %v782, 32
    %v790 = vpop.permute.xlu0 %789
    %v792 = vmul.f32 %v781, %v790
    %v793 = vadd.f32 %v787, %v792
    %v794 = vtanh.pop %v793
    %796 = vrot.lane.b32.xlu0 %v794, 64
    %v797 = vpop.permute.xlu0 %796
    %v799 = vmul.f32 %v781, %v797
    %801 = vrot.lane.b32.xlu0 %v799, 64
    %v802 = vpop.permute.xlu0 %801
    %s804 = scalar_lea.vmem [#allocation3], 56
    %805 = vst.msk [vmem:[%s804] sm:$0xff] %vm258, %v802
    %s806 = scalar_lea.vmem [#allocation4], 56
    %807 = vst.msk [vmem:[%s806] sm:$0xff] %vm258, %v793
    %v808 = vld [vmem:[#allocation3] sm:$0xff]
    %v809 = vld [vmem:[#allocation3 + $0x8] sm:$0xff]
    %v810 = vld [vmem:[#allocation3 + $0x10] sm:$0xff]
    %v811 = vld [vmem:[#allocation3 + $0x18] sm:$0xff]
    %v812 = vld [vmem:[#allocation3 + $0x20] sm:$0xff]
    %v813 = vld [vmem:[#allocation3 + $0x28] sm:$0xff]
    %v814 = vld [vmem:[#allocation3 + $0x30] sm:$0xff]
    %v815 = vld [vmem:[#allocation3 + $0x38] sm:$0xff]
    %v816 = vld [vmem:[#allocation4] sm:$0xff]
    %v817 = vld [vmem:[#allocation4 + $0x8] sm:$0xff]
    %v818 = vld [vmem:[#allocation4 + $0x10] sm:$0xff]
    %v819 = vld [vmem:[#allocation4 + $0x18] sm:$0xff]
    %v820 = vld [vmem:[#allocation4 + $0x20] sm:$0xff]
    %v821 = vld [vmem:[#allocation4 + $0x28] sm:$0xff]
    %v822 = vld [vmem:[#allocation4 + $0x30] sm:$0xff]
    %v823 = vld [vmem:[#allocation4 + $0x38] sm:$0xff]
    %v824 = vld [vmem:[#allocation14] sm:$0xff]
    %v825 = vld [vmem:[#allocation14 + $0x8] sm:$0xff]
    %v826 = vld [vmem:[#allocation14 + $0x10] sm:$0xff]
    %v827 = vld [vmem:[#allocation14 + $0x18] sm:$0xff]
    %v828 = vld [vmem:[%s7] sm:$0x1]
    %v830 = vperm.slane %v828, 0
    %v833 = vsel %vm258, %v808, 0
    %v836 = vsel %vm258, %v809, 0
    %v839 = vsel %vm258, %v810, 0
    %v842 = vsel %vm258, %v811, 0
    %v845 = vsel %vm258, %v812, 0
    %v848 = vsel %vm258, %v813, 0
    %v851 = vsel %vm258, %v814, 0
    %v854 = vsel %vm258, %v815, 0
    %856 = vmatpush.msra.mxu0 0.0
    %857 = vmatpush.msra.mxu0 0.0
    %858 = vmatpush.msra.mxu0 0.0
    %859 = vmatpush.msra.mxu0 0.0
    %860 = vmatpush.msra.mxu0 0.0
    %861 = vmatpush.msra.mxu0 0.0
    %862 = vmatpush.msra.mxu0 0.0
    %863 = vmatpush.msra.mxu0 0.0
    %864 = vmatpush.msra.mxu0 0.0
    %865 = vmatpush.msra.mxu0 0.0
    %866 = vmatpush.msra.mxu0 0.0
    %867 = vmatpush.msra.mxu0 0.0
    %868 = vmatpush.msra.mxu0 %v827
    %869 = vmatpush.msra.mxu0 %v826
    %870 = vmatpush.msra.mxu0 %v825
    %871 = vmatpush.msra.mxu0 %v824
    %872 = vmatmul.f32.gmra.mxu0 %v833
    %v873 = vpop.f32.mrf.mxu0
    %v874 = vadd.f32 %v830, %v873
    %875 = vmatmul.f32.gmra.mxu0 %v836
    %v876 = vpop.f32.mrf.mxu0
    %v877 = vadd.f32 %v830, %v876
    %878 = vmatmul.f32.gmra.mxu0 %v839
    %v879 = vpop.f32.mrf.mxu0
    %v880 = vadd.f32 %v830, %v879
    %881 = vmatmul.f32.gmra.mxu0 %v842
    %v882 = vpop.f32.mrf.mxu0
    %v883 = vadd.f32 %v830, %v882
    %884 = vmatmul.f32.gmra.mxu0 %v845
    %v885 = vpop.f32.mrf.mxu0
    %v886 = vadd.f32 %v830, %v885
    %887 = vmatmul.f32.gmra.mxu0 %v848
    %v888 = vpop.f32.mrf.mxu0
    %v889 = vadd.f32 %v830, %v888
    %890 = vmatmul.f32.gmra.mxu0 %v851
    %v891 = vpop.f32.mrf.mxu0
    %v892 = vadd.f32 %v830, %v891
    %893 = vmatmul.f32.gmra.mxu0 %v854
    %v894 = vpop.f32.mrf.mxu0
    %v895 = vadd.f32 %v830, %v894
    %896 = vdwg.mxu0
    %vm897 = vcmask 523264
    %v898 = vsel %vm897, %v874, -inf
    %899 = vmax.xlane.f32.xlu0 %v898
    %v900 = vpop.xlane.xlu0 %899
    %v901 = vsel %vm897, %v877, -inf
    %902 = vmax.xlane.f32.xlu0 %v901
    %v903 = vpop.xlane.xlu0 %902
    %v904 = vsel %vm897, %v880, -inf
    %905 = vmax.xlane.f32.xlu0 %v904
    %v906 = vpop.xlane.xlu0 %905
    %v907 = vsel %vm897, %v883, -inf
    %908 = vmax.xlane.f32.xlu0 %v907
    %v909 = vpop.xlane.xlu0 %908
    %v910 = vsel %vm897, %v886, -inf
    %911 = vmax.xlane.f32.xlu0 %v910
    %v912 = vpop.xlane.xlu0 %911
    %v913 = vsel %vm897, %v889, -inf
    %914 = vmax.xlane.f32.xlu0 %v913
    %v915 = vpop.xlane.xlu0 %914
    %v916 = vsel %vm897, %v892, -inf
    %917 = vmax.xlane.f32.xlu0 %v916
    %v918 = vpop.xlane.xlu0 %917
    %v919 = vsel %vm897, %v895, -inf
    %920 = vmax.xlane.f32.xlu0 %v919
    %v921 = vpop.xlane.xlu0 %920
    %v922 = vsub.f32 %v874, %v900
    %v923 = vsub.f32 %v877, %v903
    %v924 = vsub.f32 %v880, %v906
    %v925 = vsub.f32 %v883, %v909
    %v926 = vsub.f32 %v886, %v912
    %v927 = vsub.f32 %v889, %v915
    %v928 = vsub.f32 %v892, %v918
    %v929 = vsub.f32 %v895, %v921
    %v930 = vmul.f32 %v922, 1.442695
    %v931 = vpow.pop %v930
    %v932 = vmul.f32 %v923, 1.442695
    %v933 = vpow.pop %v932
    %v934 = vmul.f32 %v924, 1.442695
    %v935 = vpow.pop %v934
    %v936 = vmul.f32 %v925, 1.442695
    %v937 = vpow.pop %v936
    %v938 = vmul.f32 %v926, 1.442695
    %v939 = vpow.pop %v938
    %v940 = vmul.f32 %v927, 1.442695
    %v941 = vpow.pop %v940
    %v942 = vmul.f32 %v928, 1.442695
    %v943 = vpow.pop %v942
    %v944 = vmul.f32 %v929, 1.442695
    %v945 = vpow.pop %v944
    %v946 = vsel %vm897, %v931, 0.0
    %947 = vadd.xlane.f32.xlu0 %v946
    %v948 = vpop.xlane.xlu0 %947
    %v949 = vsel %vm897, %v933, 0.0
    %950 = vadd.xlane.f32.xlu0 %v949
    %v951 = vpop.xlane.xlu0 %950
    %v952 = vsel %vm897, %v935, 0.0
    %953 = vadd.xlane.f32.xlu0 %v952
    %v954 = vpop.xlane.xlu0 %953
    %v955 = vsel %vm897, %v937, 0.0
    %956 = vadd.xlane.f32.xlu0 %v955
    %v957 = vpop.xlane.xlu0 %956
    %v958 = vsel %vm897, %v939, 0.0
    %959 = vadd.xlane.f32.xlu0 %v958
    %v960 = vpop.xlane.xlu0 %959
    %v961 = vsel %vm897, %v941, 0.0
    %962 = vadd.xlane.f32.xlu0 %v961
    %v963 = vpop.xlane.xlu0 %962
    %v964 = vsel %vm897, %v943, 0.0
    %965 = vadd.xlane.f32.xlu0 %v964
    %v966 = vpop.xlane.xlu0 %965
    %v967 = vsel %vm897, %v945, 0.0
    %968 = vadd.xlane.f32.xlu0 %v967
    %v969 = vpop.xlane.xlu0 %968
    %v970 = vrcp.pop %v948
    %v971 = vmul.f32 %v948, %v970
    %v972 = vsub.f32 1.0, %v971
    %v973 = vmul.f32 %v970, %v972
    %v974 = vadd.f32 %v970, %v973
    %vm975 = vweird.f32 %v948
    %vm976 = vweird.f32 %v970
    %vm977 = vmor %vm975, %vm976
    %v978 = vsel %vm977, %v970, %v974
    %v979 = vand.u32 2147483647, %v948
    %vm980 = vcmp.eq.f32.partialorder %v979, 8.507059e+37
    %v981 = vand.u32 %v948, 2147483648
    %v982 = vor.u32 1.1754944e-38, %v981
    %v983 = vsel %vm980, %v982, %v978
    %v984 = vmul.f32 %v931, %v983
    %v985 = vrcp.pop %v951
    %v986 = vmul.f32 %v951, %v985
    %v987 = vsub.f32 1.0, %v986
    %v988 = vmul.f32 %v985, %v987
    %v989 = vadd.f32 %v985, %v988
    %vm990 = vweird.f32 %v951
    %vm991 = vweird.f32 %v985
    %vm992 = vmor %vm990, %vm991
    %v993 = vsel %vm992, %v985, %v989
    %v994 = vand.u32 2147483647, %v951
    %vm995 = vcmp.eq.f32.partialorder %v994, 8.507059e+37
    %v996 = vand.u32 %v951, 2147483648
    %v997 = vor.u32 1.1754944e-38, %v996
    %v998 = vsel %vm995, %v997, %v993
    %v999 = vmul.f32 %v933, %v998
    %v1000 = vrcp.pop %v954
    %v1001 = vmul.f32 %v954, %v1000
    %v1002 = vsub.f32 1.0, %v1001
    %v1003 = vmul.f32 %v1000, %v1002
    %v1004 = vadd.f32 %v1000, %v1003
    %vm1005 = vweird.f32 %v954
    %vm1006 = vweird.f32 %v1000
    %vm1007 = vmor %vm1005, %vm1006
    %v1008 = vsel %vm1007, %v1000, %v1004
    %v1009 = vand.u32 2147483647, %v954
    %vm1010 = vcmp.eq.f32.partialorder %v1009, 8.507059e+37
    %v1011 = vand.u32 %v954, 2147483648
    %v1012 = vor.u32 1.1754944e-38, %v1011
    %v1013 = vsel %vm1010, %v1012, %v1008
    %v1014 = vmul.f32 %v935, %v1013
    %v1015 = vrcp.pop %v957
    %v1016 = vmul.f32 %v957, %v1015
    %v1017 = vsub.f32 1.0, %v1016
    %v1018 = vmul.f32 %v1015, %v1017
    %v1019 = vadd.f32 %v1015, %v1018
    %vm1020 = vweird.f32 %v957
    %vm1021 = vweird.f32 %v1015
    %vm1022 = vmor %vm1020, %vm1021
    %v1023 = vsel %vm1022, %v1015, %v1019
    %v1024 = vand.u32 2147483647, %v957
    %vm1025 = vcmp.eq.f32.partialorder %v1024, 8.507059e+37
    %v1026 = vand.u32 %v957, 2147483648
    %v1027 = vor.u32 1.1754944e-38, %v1026
    %v1028 = vsel %vm1025, %v1027, %v1023
    %v1029 = vmul.f32 %v937, %v1028
    %v1030 = vrcp.pop %v960
    %v1031 = vmul.f32 %v960, %v1030
    %v1032 = vsub.f32 1.0, %v1031
    %v1033 = vmul.f32 %v1030, %v1032
    %v1034 = vadd.f32 %v1030, %v1033
    %vm1035 = vweird.f32 %v960
    %vm1036 = vweird.f32 %v1030
    %vm1037 = vmor %vm1035, %vm1036
    %v1038 = vsel %vm1037, %v1030, %v1034
    %v1039 = vand.u32 2147483647, %v960
    %vm1040 = vcmp.eq.f32.partialorder %v1039, 8.507059e+37
    %v1041 = vand.u32 %v960, 2147483648
    %v1042 = vor.u32 1.1754944e-38, %v1041
    %v1043 = vsel %vm1040, %v1042, %v1038
    %v1044 = vmul.f32 %v939, %v1043
    %v1045 = vrcp.pop %v963
    %v1046 = vmul.f32 %v963, %v1045
    %v1047 = vsub.f32 1.0, %v1046
    %v1048 = vmul.f32 %v1045, %v1047
    %v1049 = vadd.f32 %v1045, %v1048
    %vm1050 = vweird.f32 %v963
    %vm1051 = vweird.f32 %v1045
    %vm1052 = vmor %vm1050, %vm1051
    %v1053 = vsel %vm1052, %v1045, %v1049
    %v1054 = vand.u32 2147483647, %v963
    %vm1055 = vcmp.eq.f32.partialorder %v1054, 8.507059e+37
    %v1056 = vand.u32 %v963, 2147483648
    %v1057 = vor.u32 1.1754944e-38, %v1056
    %v1058 = vsel %vm1055, %v1057, %v1053
    %v1059 = vmul.f32 %v941, %v1058
    %v1060 = vrcp.pop %v966
    %v1061 = vmul.f32 %v966, %v1060
    %v1062 = vsub.f32 1.0, %v1061
    %v1063 = vmul.f32 %v1060, %v1062
    %v1064 = vadd.f32 %v1060, %v1063
    %vm1065 = vweird.f32 %v966
    %vm1066 = vweird.f32 %v1060
    %vm1067 = vmor %vm1065, %vm1066
    %v1068 = vsel %vm1067, %v1060, %v1064
    %v1069 = vand.u32 2147483647, %v966
    %vm1070 = vcmp.eq.f32.partialorder %v1069, 8.507059e+37
    %v1071 = vand.u32 %v966, 2147483648
    %v1072 = vor.u32 1.1754944e-38, %v1071
    %v1073 = vsel %vm1070, %v1072, %v1068
    %v1074 = vmul.f32 %v943, %v1073
    %v1075 = vrcp.pop %v969
    %v1076 = vmul.f32 %v969, %v1075
    %v1077 = vsub.f32 1.0, %v1076
    %v1078 = vmul.f32 %v1075, %v1077
    %v1079 = vadd.f32 %v1075, %v1078
    %vm1080 = vweird.f32 %v969
    %vm1081 = vweird.f32 %v1075
    %vm1082 = vmor %vm1080, %vm1081
    %v1083 = vsel %vm1082, %v1075, %v1079
    %v1084 = vand.u32 2147483647, %v969
    %vm1085 = vcmp.eq.f32.partialorder %v1084, 8.507059e+37
    %v1086 = vand.u32 %v969, 2147483648
    %v1087 = vor.u32 1.1754944e-38, %v1086
    %v1088 = vsel %vm1085, %v1087, %v1083
    %v1089 = vmul.f32 %v945, %v1088
    %1098 = vrot.lane.b32.xlu0 %v816, 32
    %v1099 = vpop.permute.xlu0 %1098
    %1100 = vrot.lane.b32.xlu0 %v817, 32
    %v1101 = vpop.permute.xlu0 %1100
    %1102 = vrot.lane.b32.xlu0 %v818, 32
    %v1103 = vpop.permute.xlu0 %1102
    %1104 = vrot.lane.b32.xlu0 %v819, 32
    %v1105 = vpop.permute.xlu0 %1104
    %1106 = vrot.lane.b32.xlu0 %v820, 32
    %v1107 = vpop.permute.xlu0 %1106
    %1108 = vrot.lane.b32.xlu0 %v821, 32
    %v1109 = vpop.permute.xlu0 %1108
    %1110 = vrot.lane.b32.xlu0 %v822, 32
    %v1111 = vpop.permute.xlu0 %1110
    %1112 = vrot.lane.b32.xlu0 %v823, 32
    %v1113 = vpop.permute.xlu0 %1112
    %1130 = vrot.lane.b32.xlu0 %v984, 64
    %v1131 = vpop.permute.xlu0 %1130
    %1132 = vrot.lane.b32.xlu0 %v999, 64
    %v1133 = vpop.permute.xlu0 %1132
    %1134 = vrot.lane.b32.xlu0 %v1014, 64
    %v1135 = vpop.permute.xlu0 %1134
    %1136 = vrot.lane.b32.xlu0 %v1029, 64
    %v1137 = vpop.permute.xlu0 %1136
    %1138 = vrot.lane.b32.xlu0 %v1044, 64
    %v1139 = vpop.permute.xlu0 %1138
    %1140 = vrot.lane.b32.xlu0 %v1059, 64
    %v1141 = vpop.permute.xlu0 %1140
    %1142 = vrot.lane.b32.xlu0 %v1074, 64
    %v1143 = vpop.permute.xlu0 %1142
    %1144 = vrot.lane.b32.xlu0 %v1089, 64
    %v1145 = vpop.permute.xlu0 %1144
    %v1154 = vsel %vm258, %v808, %v1099
    %v1155 = vsel %vm258, %v809, %v1101
    %v1156 = vsel %vm258, %v810, %v1103
    %v1157 = vsel %vm258, %v811, %v1105
    %v1158 = vsel %vm258, %v812, %v1107
    %v1159 = vsel %vm258, %v813, %v1109
    %v1160 = vsel %vm258, %v814, %v1111
    %v1161 = vsel %vm258, %v815, %v1113
    %v1162 = vsel %vm897, %v1154, %v1131
    %v1163 = vsel %vm897, %v1155, %v1133
    %v1164 = vsel %vm897, %v1156, %v1135
    %v1165 = vsel %vm897, %v1157, %v1137
    %v1166 = vsel %vm897, %v1158, %v1139
    %v1167 = vsel %vm897, %v1159, %v1141
    %v1168 = vsel %vm897, %v1160, %v1143
    %v1169 = vsel %vm897, %v1161, %v1145
    %1170 = vst [vmem:[#allocation16] sm:$0xff] %v1162
    %1171 = vst [vmem:[#allocation16 + $0x8] sm:$0xff] %v1163
    %1172 = vst [vmem:[#allocation16 + $0x10] sm:$0xff] %v1164
    %1173 = vst [vmem:[#allocation16 + $0x18] sm:$0xff] %v1165
    %1174 = vst [vmem:[#allocation16 + $0x20] sm:$0xff] %v1166
    %1175 = vst [vmem:[#allocation16 + $0x28] sm:$0xff] %v1167
    %1176 = vst [vmem:[#allocation16 + $0x30] sm:$0xff] %v1168
    %1177 = vst [vmem:[#allocation16 + $0x38] sm:$0xff] %v1169
    // Predicated region
    $region58: #{tpu_custom_call.1} parent=1 // pred_check
      _
    $region59: #{tpu_custom_call.1} parent=1 // pred_check_branch
      %1179 = sbr.rel (0) target = $region61
    $region60: #{tpu_custom_call.1} parent=1 // pred_region
      %1181 = vsyncadd [#allocation7], 0
      %s1182 = sshll.u32 [#allocation16], 4
      %s1183 = int_to_ptr.vmem [resolvable:$true] %s1182
      %s1184 = sshll.u32 %s8, 4
      %s1185 = int_to_ptr.hbm [resolvable:$true] %s1184
      %1190 = dma.vmem_to_hbm [thread:$0]  %s1183, 1024, %s1185, [#allocation7], 128, 128, 8
    $region61: #{tpu_custom_call.1} parent=1 // pred_fallthru
      _
    // Predicated region
    $region62: #{tpu_custom_call.1} parent=1 // pred_check
      _
    $region63: #{tpu_custom_call.1} parent=1 // pred_check_branch
      %1192 = sbr.rel (0) target = $region65
    $region64: #{tpu_custom_call.1} parent=1 // pred_region
      %1194 = dma.done [#allocation7], 1024
    $region65: #{tpu_custom_call.1} parent=1 // pred_fallthru
      _
    %1195 = vsyncpa [#allocation6], 1
    %1196 = vsyncpa [#allocation9], 1
    %1197 = vsyncpa [#allocation12], 1
    %1198 = vsyncpa [#allocation15], 1
    %1199 = vsyncpa [#allocation7], 1

</llo_original>
